<compile_context>
chip_gen: v6e
topology: v6e:2x2x1
jax: 0.10.0
libtpu: 0.0.40
codegen_flags: <defaults>
</compile_context>

<pallas_src>
import functools

import jax
import jax.numpy as jnp
from jax.experimental import pallas as pl
from jax.experimental.pallas import tpu as pltpu

_EPS = 1e-5
_NEG_SLOPE = 0.01      # PyTorch LeakyReLU default
_LOG_CLAMP = -100.0    # PyTorch BCELoss clamp


def _loss_kernel(feats_ref, idx_ref, labels_ref, w1f_ref, w1c_ref, w2_ref,
                 b2_ref, out_ref, s1_ref, s2_ref, hcache_ref, *,
                 batch, num_classes, tile, needs_mask):
    t = pl.program_id(0)
    nt = pl.num_programs(0)
    inv_b = 1.0 / float(batch)

    @pl.when(t == 0)
    def _init():
        s1_ref[...] = jnp.zeros_like(s1_ref)
        s2_ref[...] = jnp.zeros_like(s2_ref)

    # ---- fc1 for this batch tile (inputs streamed from HBM exactly once) ----
    feats = feats_ref[...].astype(jnp.float32)                      # (tile, F)
    onehot = (jax.lax.broadcasted_iota(jnp.int32, (tile, num_classes), 1)
              == idx_ref[...]).astype(jnp.float32)                  # (tile, C)
    # h = [feats, onehot] @ [[W1f], [W1c]] = feats@W1f + onehot@W1c
    h = (jnp.dot(feats, w1f_ref[...].astype(jnp.float32),
                 preferred_element_type=jnp.float32)
         + jnp.dot(onehot, w1c_ref[...].astype(jnp.float32),
                   preferred_element_type=jnp.float32))             # (tile, H)

    # ---- one-pass BatchNorm statistics (padded rows masked out) ----
    if needs_mask:
        rows = jax.lax.broadcasted_iota(jnp.int32, (tile, 1), 0) + t * tile
        h_m = jnp.where(rows < batch, h, 0.0)
    else:
        h_m = h
    s1_ref[...] += jnp.sum(h_m, axis=0, keepdims=True)
    s2_ref[...] += jnp.sum(h_m * h_m, axis=0, keepdims=True)

    # ---- cache h so nothing is re-streamed / re-computed ----
    start = pl.multiple_of(t * tile, tile)
    hcache_ref[pl.ds(start, tile), :] = h

    # ---- epilogue on the full cached batch, lane-dense ----
    @pl.when(t == nt - 1)
    def _finalize():
        mean = s1_ref[...] * inv_b                                   # (1, H)
        var = jnp.maximum(s2_ref[...] * inv_b - mean * mean, 0.0)    # biased
        rstd = jax.lax.rsqrt(var + _EPS)

        hall = hcache_ref[...]                                       # (B_pad, H)
        hn = (hall - mean) * rstd                                    # BatchNorm
        hn = jnp.where(hn >= 0.0, hn, _NEG_SLOPE * hn)               # LeakyReLU

        # fc2 as (1,H) x (B_pad,H) contracting H -> lane-dense (1, B_pad).
        logits = jax.lax.dot_general(
            w2_ref[...].astype(jnp.float32), hn,
            (((1,), (1,)), ((), ())),
            preferred_element_type=jnp.float32) + b2_ref[0, 0]       # (1, B_pad)

        # BCE from logits (log-sigmoid / softplus form; mathematically equal
        # to PyTorch's sigmoid-then-clamped-log, more accurate in the tails).
        sp_pos = jnp.maximum(logits, 0.0) + jnp.log(1.0 + jnp.exp(-jnp.abs(logits)))
        logp = jnp.maximum(logits - sp_pos, _LOG_CLAMP)     # log(sigmoid(x))
        log1mp = jnp.maximum(-sp_pos, _LOG_CLAMP)           # log(1-sigmoid(x))

        y = labels_ref[...]                                          # (1, B_pad)
        terms = y * logp + (1.0 - y) * log1mp
        if needs_mask:
            cols = jax.lax.broadcasted_iota(jnp.int32, terms.shape, 1)
            terms = jnp.where(cols < batch, terms, 0.0)
        out_ref[...] = -(jnp.sum(terms, axis=1, keepdims=True) * inv_b)


def loss_model_forward(feats, classes, labels, w1, w2, b2, *, max_batch_tile=4096):
    """Pallas implementation of LossModel.forward -> scalar loss.

    feats:   (B, F) float
    classes: (B,)/(B,1) int class indices (preferred: streamed as 4 B/row) or
             a (B, C) one-hot float matrix (converted to indices here).
    labels:  (B,) or (B, 1) float in [0, 1]
    w1:      (F + C, H)  fc1 weight (math orientation, no bias)
    w2:      (H, 1)      fc2 weight
    b2:      scalar / (1,) / (1, 1)  fc2 bias
    """
    feats = jnp.asarray(feats)
    B, F = feats.shape
    D, H = w1.shape
    C = D - F

    classes = jnp.asarray(classes)
    if jnp.issubdtype(classes.dtype, jnp.integer):
        cls_idx = classes.reshape(B).astype(jnp.int32)
    else:
        # One-hot given: collapse to indices (callers should pass indices to
        # avoid this extra XLA pass over the (B, C) matrix).
        cls_idx = jnp.argmax(classes.reshape(B, C), axis=1).astype(jnp.int32)
    labels_f = jnp.asarray(labels, jnp.float32).reshape(B)

    # ---- tile / padding selection: biggest tile that fits, collapse grid ----
    cap = max(8, (int(max_batch_tile) // 8) * 8)
    if B <= cap:
        tile = ((B + 7) // 8) * 8          # single tile = whole (padded) batch
    else:
        tile = cap
    b_pad = ((B + tile - 1) // tile) * tile
    nt = b_pad // tile
    needs_mask = (b_pad != B)

    # VMEM sizing (against v7x's 64 MiB physical VMEM): h-cache + epilogue
    # temporaries + double-buffered input tiles + weights.
    lane = 128
    hcache_bytes = b_pad * max(H, lane) * 4
    est = (3 * hcache_bytes                       # cache + epilogue temps
           + 8 * b_pad * 4                        # labels row (sublane-padded)
           + 2 * tile * max(F, lane) * 4          # feats double buffer
           + 2 * tile * lane * 4                  # class-index double buffer
           + (D + 2) * max(H, lane) * 4)          # weights
    if est > 24 * 1024 * 1024:
        # TODO(synk): streamed two-pass fallback for batches beyond the VMEM
        # h-cache budget; not needed for GAN loss-head batch sizes.
        raise NotImplementedError(
            f"batch {B} exceeds the VMEM h-cache budget for this kernel")

    if needs_mask:
        pad = b_pad - B
        feats = jnp.pad(feats, ((0, pad), (0, 0)))
        cls_idx = jnp.pad(cls_idx, ((0, pad),))
        labels_f = jnp.pad(labels_f, ((0, pad),))

    idx2 = cls_idx.reshape(b_pad, 1)
    labels2 = labels_f.reshape(1, b_pad)          # lane-dense labels
    w1_f = w1[:F, :]                              # (F, H)
    w1_c = w1[F:, :]                              # (C, H)
    w2_row = w2.reshape(1, H)
    b2_s = jnp.asarray(b2, jnp.float32).reshape(1, 1)

    kernel = functools.partial(
        _loss_kernel, batch=B, num_classes=C, tile=tile, needs_mask=needs_mask)

    cost = pl.CostEstimate(
        flops=2 * B * D * H + 12 * B * H + 10 * B,
        transcendentals=2 * B + H,
        bytes_accessed=(B * F + 2 * B + D * H + H + 2) * 4,
    )

    out = pl.pallas_call(
        kernel,
        out_shape=jax.ShapeDtypeStruct((1, 1), jnp.float32),
        grid_spec=pltpu.PrefetchScalarGridSpec(
            num_scalar_prefetch=0,
            grid=(nt,),
            in_specs=[
                pl.BlockSpec((tile, F), lambda t: (t, 0)),        # feats tiles
                pl.BlockSpec((tile, 1), lambda t: (t, 0)),        # class idx tiles
                pl.BlockSpec((1, b_pad), lambda t: (0, 0)),       # labels (once)
                pl.BlockSpec((F, H), lambda t: (0, 0)),           # W1 (feats part)
                pl.BlockSpec((C, H), lambda t: (0, 0)),           # W1 (class part)
                pl.BlockSpec((1, H), lambda t: (0, 0)),           # W2 row
                pl.BlockSpec(memory_space=pltpu.MemorySpace.SMEM),  # b2 scalar
            ],
            out_specs=pl.BlockSpec((1, 1), lambda t: (0, 0)),
            scratch_shapes=[
                pltpu.VMEM((1, H), jnp.float32),          # s1 = sum(h)
                pltpu.VMEM((1, H), jnp.float32),          # s2 = sum(h*h)
                pltpu.VMEM((b_pad, H), jnp.float32),      # h cache (whole batch)
            ],
        ),
        compiler_params=pltpu.CompilerParams(
            # Batch axis is a reduction (BN stats + mean loss) -> "arbitrary".
            dimension_semantics=("arbitrary",),
            vmem_limit_bytes=48 * 1024 * 1024,
        ),
        cost_estimate=cost,
    )(feats, idx2, labels2, w1_f, w1_c, w2_row, b2_s)
    return out[0, 0]


def _reference(feats, classes_onehot, labels, w1, w2, b2):
    x = jnp.concatenate([feats, classes_onehot], axis=1)
    h = x @ w1
    mean = jnp.mean(h, axis=0, keepdims=True)
    var = jnp.mean((h - mean) ** 2, axis=0, keepdims=True)
    h = (h - mean) / jnp.sqrt(var + _EPS)
    h = jnp.where(h >= 0, h, _NEG_SLOPE * h)
    p = jax.nn.sigmoid(h @ w2 + jnp.reshape(b2, (1, 1)))
    labels = labels.reshape(-1, 1)
    loss = -jnp.mean(labels * jnp.maximum(jnp.log(p), _LOG_CLAMP)
                     + (1 - labels) * jnp.maximum(jnp.log(1 - p), _LOG_CLAMP))
    return loss


if __name__ == "__main__":
    B, feats_dim, num_classes, hidden_dim = 256, 16, 10, 32
    D = feats_dim + num_classes

    key = jax.random.PRNGKey(0)
    k_feats, k_cls, k_lab, k_w1, k_w2, k_b2 = jax.random.split(key, 6)

    feats = jax.random.normal(k_feats, (B, feats_dim), dtype=jnp.float32)
    cls_idx = jax.random.randint(k_cls, (B,), 0, num_classes, dtype=jnp.int32)
    classes_onehot = jax.nn.one_hot(cls_idx, num_classes, dtype=jnp.float32)
    labels = jax.random.bernoulli(k_lab, 0.5, (B, 1)).astype(jnp.float32)

    # Deterministic PyTorch-like init: U(-1/sqrt(fan_in), 1/sqrt(fan_in)).
    bound1 = 1.0 / jnp.sqrt(float(D))
    w1 = jax.random.uniform(k_w1, (D, hidden_dim), jnp.float32, -bound1, bound1)
    bound2 = 1.0 / jnp.sqrt(float(hidden_dim))
    w2 = jax.random.uniform(k_w2, (hidden_dim, 1), jnp.float32, -bound2, bound2)
    b2 = jax.random.uniform(k_b2, (1, 1), jnp.float32, -bound2, bound2)

    ref = _reference(feats, classes_onehot, labels, w1, w2, b2)

    # 1) Default path: grid collapses to a single step (tile = whole batch),
    #    class indices streamed (4 B/row).
    loss1 = jax.block_until_ready(
        loss_model_forward(feats, cls_idx, labels, w1, w2, b2))
    assert jnp.allclose(loss1, ref, atol=1e-4, rtol=1e-4), (loss1, ref)

    # 2) Tiled path: grid=(2,), exercises the VMEM h-cache across tiles.
    loss2 = jax.block_until_ready(
        loss_model_forward(feats, cls_idx, labels, w1, w2, b2,
                           max_batch_tile=128))
    assert jnp.allclose(loss2, ref, atol=1e-4, rtol=1e-4), (loss2, ref)

    # 3) Ragged batch (B=250 -> padded to 256) with one-hot class input:
    #    exercises the masking path and the one-hot -> index conversion.
    Bs = 250
    loss3 = jax.block_until_ready(
        loss_model_forward(feats[:Bs], classes_onehot[:Bs], labels[:Bs],
                           w1, w2, b2, max_batch_tile=128))
    ref3 = _reference(feats[:Bs], classes_onehot[:Bs], labels[:Bs], w1, w2, b2)
    assert jnp.allclose(loss3, ref3, atol=1e-4, rtol=1e-4), (loss3, ref3)

    print("KERNEL_OK")
</pallas_src>

<mosaic_0001>
module attributes {stable_mosaic.version = 11 : i64} {
  func.func @_loss_kernel(%arg0: i32, %arg1: memref<256x16xf32, #tpu.memory_space<vmem>>, %arg2: memref<256x1xi32, #tpu.memory_space<vmem>>, %arg3: memref<1x256xf32, #tpu.memory_space<vmem>>, %arg4: memref<16x32xf32, #tpu.memory_space<vmem>>, %arg5: memref<10x32xf32, #tpu.memory_space<vmem>>, %arg6: memref<1x32xf32, #tpu.memory_space<vmem>>, %arg7: memref<1x1xf32, #tpu.memory_space<smem>>, %arg8: memref<1x1xf32, #tpu.memory_space<vmem>>, %arg9: memref<1x32xf32, #tpu.memory_space<vmem>>, %arg10: memref<1x32xf32, #tpu.memory_space<vmem>>, %arg11: memref<256x32xf32, #tpu.memory_space<vmem>>) attributes {dimension_semantics = [#tpu.dimension_semantics<arbitrary>], iteration_bounds = array<i64: 1>, scalar_prefetch = 0 : i64, scratch_operands = 3 : i64, tpu.core_type = #tpu.core_type<tc>, window_params = [{transform_indices = @transform_0, window_bounds = array<i64: 256, 16>}, {transform_indices = @transform_1, window_bounds = array<i64: 256, 1>}, {pipeline_mode = #tpu.pipeline_mode<synchronous>, transform_indices = @transform_2, window_bounds = array<i64: 1, 256>}, {pipeline_mode = #tpu.pipeline_mode<synchronous>, transform_indices = @transform_3, window_bounds = array<i64: 16, 32>}, {pipeline_mode = #tpu.pipeline_mode<synchronous>, transform_indices = @transform_4, window_bounds = array<i64: 10, 32>}, {pipeline_mode = #tpu.pipeline_mode<synchronous>, transform_indices = @transform_5, window_bounds = array<i64: 1, 32>}, {transform_indices = @transform_6, window_bounds = array<i64: 1, 1>}, {pipeline_mode = #tpu.pipeline_mode<synchronous>, transform_indices = @transform_7, window_bounds = array<i64: 1, 1>}]} {
    %c0_i32 = arith.constant 0 : i32
    %0 = arith.cmpi eq, %arg0, %c0_i32 : i32
    %1 = arith.extui %0 : i1 to i32
    %c0_i32_0 = arith.constant 0 : i32
    %2 = arith.cmpi ne, %1, %c0_i32_0 : i32
    scf.if %2 {
      %cst_22 = arith.constant 0.000000e+00 : f32
      %33 = vector.broadcast %cst_22 : f32 to vector<1x32xf32>
      %c0_23 = arith.constant 0 : index
      %c0_24 = arith.constant 0 : index
      %34 = vector.load %arg9[%c0_23, %c0_24] : memref<1x32xf32, #tpu.memory_space<vmem>>, vector<1x32xf32>
      tpu.vector_store %arg9[%c0_23, %c0_24], %33 {strides = array<i32>} : memref<1x32xf32, #tpu.memory_space<vmem>>, vector<1x32xf32>,
      %cst_25 = arith.constant 0.000000e+00 : f32
      %35 = vector.broadcast %cst_25 : f32 to vector<1x32xf32>
      %c0_26 = arith.constant 0 : index
      %c0_27 = arith.constant 0 : index
      %36 = vector.load %arg10[%c0_26, %c0_27] : memref<1x32xf32, #tpu.memory_space<vmem>>, vector<1x32xf32>
      tpu.vector_store %arg10[%c0_26, %c0_27], %35 {strides = array<i32>} : memref<1x32xf32, #tpu.memory_space<vmem>>, vector<1x32xf32>,
    } else {
    }
    %c0 = arith.constant 0 : index
    %c0_1 = arith.constant 0 : index
    %3 = vector.load %arg1[%c0, %c0_1] : memref<256x16xf32, #tpu.memory_space<vmem>>, vector<256x16xf32>
    %4 = tpu.iota {dimensions = array<i32: 1>} : vector<256x10xi32>
    %c0_2 = arith.constant 0 : index
    %c0_3 = arith.constant 0 : index
    %5 = vector.load %arg2[%c0_2, %c0_3] : memref<256x1xi32, #tpu.memory_space<vmem>>, vector<256x1xi32>
    %6 = vector.broadcast %5 : vector<256x1xi32> to vector<256x10xi32>
    %7 = arith.cmpi eq, %4, %6 : vector<256x10xi32>
    %8 = arith.extui %7 : vector<256x10xi1> to vector<256x10xi32>
    %9 = arith.sitofp %8 : vector<256x10xi32> to vector<256x10xf32>
    %c0_4 = arith.constant 0 : index
    %c0_5 = arith.constant 0 : index
    %10 = vector.load %arg4[%c0_4, %c0_5] : memref<16x32xf32, #tpu.memory_space<vmem>>, vector<16x32xf32>
    %cst = arith.constant dense<0.000000e+00> : vector<256x32xf32>
    %11 = tpu.matmul %3, %10, %cst {dimension_numbers = #tpu.dot_dimension_numbers<[1], [0], [0], [1], [0, 0, 1, 1], [], []>} : vector<256x16xf32>, vector<16x32xf32>, vector<256x32xf32> -> vector<256x32xf32>
    %c0_6 = arith.constant 0 : index
    %c0_7 = arith.constant 0 : index
    %12 = vector.load %arg5[%c0_6, %c0_7] : memref<10x32xf32, #tpu.memory_space<vmem>>, vector<10x32xf32>
    %cst_8 = arith.constant dense<0.000000e+00> : vector<256x32xf32>
    %13 = tpu.matmul %9, %12, %cst_8 {dimension_numbers = #tpu.dot_dimension_numbers<[1], [0], [0], [1], [0, 0, 1, 1], [], []>} : vector<256x10xf32>, vector<10x32xf32>, vector<256x32xf32> -> vector<256x32xf32>
    %14 = arith.addf %11, %13 : vector<256x32xf32>
    %c0_9 = arith.constant 0 : index
    %c0_10 = arith.constant 0 : index
    %15 = vector.load %arg9[%c0_9, %c0_10] : memref<1x32xf32, #tpu.memory_space<vmem>>, vector<1x32xf32>
    %cst_11 = arith.constant dense<0.000000e+00> : vector<32xf32>
    %16 = vector.multi_reduction <add>, %14, %cst_11 [0] : vector<256x32xf32> to vector<32xf32>
    %17 = vector.shape_cast %16 : vector<32xf32> to vector<1x32xf32>
    %18 = arith.addf %15, %17 : vector<1x32xf32>
    %c0_12 = arith.constant 0 : index
    %c0_13 = arith.constant 0 : index
    %19 = vector.load %arg9[%c0_12, %c0_13] : memref<1x32xf32, #tpu.memory_space<vmem>>, vector<1x32xf32>
    tpu.vector_store %arg9[%c0_12, %c0_13], %18 {strides = array<i32>} : memref<1x32xf32, #tpu.memory_space<vmem>>, vector<1x32xf32>,
    %c0_14 = arith.constant 0 : index
    %c0_15 = arith.constant 0 : index
    %20 = vector.load %arg10[%c0_14, %c0_15] : memref<1x32xf32, #tpu.memory_space<vmem>>, vector<1x32xf32>
    %21 = arith.mulf %14, %14 : vector<256x32xf32>
    %cst_16 = arith.constant dense<0.000000e+00> : vector<32xf32>
    %22 = vector.multi_reduction <add>, %21, %cst_16 [0] : vector<256x32xf32> to vector<32xf32>
    %23 = vector.shape_cast %22 : vector<32xf32> to vector<1x32xf32>
    %24 = arith.addf %20, %23 : vector<1x32xf32>
    %c0_17 = arith.constant 0 : index
    %c0_18 = arith.constant 0 : index
    %25 = vector.load %arg10[%c0_17, %c0_18] : memref<1x32xf32, #tpu.memory_space<vmem>>, vector<1x32xf32>
    tpu.vector_store %arg10[%c0_17, %c0_18], %24 {strides = array<i32>} : memref<1x32xf32, #tpu.memory_space<vmem>>, vector<1x32xf32>,
    %c256_i32 = arith.constant 256 : i32
    %26 = arith.muli %arg0, %c256_i32 : i32
    %27 = tpu.assume_multiple %26, 256 : i32
    %28 = arith.index_cast %27 : i32 to index
    %c0_19 = arith.constant 0 : index
    %29 = vector.load %arg11[%28, %c0_19] : memref<256x32xf32, #tpu.memory_space<vmem>>, vector<256x32xf32>
    tpu.vector_store %arg11[%28, %c0_19], %14 {strides = array<i32>} : memref<256x32xf32, #tpu.memory_space<vmem>>, vector<256x32xf32>,
    %c0_i32_20 = arith.constant 0 : i32
    %30 = arith.cmpi eq, %arg0, %c0_i32_20 : i32
    %31 = arith.extui %30 : i1 to i32
    %c0_i32_21 = arith.constant 0 : i32
    %32 = arith.cmpi ne, %31, %c0_i32_21 : i32
    scf.if %32 {
      %c0_22 = arith.constant 0 : index
      %c0_23 = arith.constant 0 : index
      %33 = vector.load %arg9[%c0_22, %c0_23] : memref<1x32xf32, #tpu.memory_space<vmem>>, vector<1x32xf32>
      %cst_24 = arith.constant 3.906250e-03 : f32
      %34 = vector.broadcast %cst_24 : f32 to vector<1x32xf32>
      %35 = arith.mulf %33, %34 : vector<1x32xf32>
      %c0_25 = arith.constant 0 : index
      %c0_26 = arith.constant 0 : index
      %36 = vector.load %arg10[%c0_25, %c0_26] : memref<1x32xf32, #tpu.memory_space<vmem>>, vector<1x32xf32>
      %cst_27 = arith.constant 3.906250e-03 : f32
      %37 = vector.broadcast %cst_27 : f32 to vector<1x32xf32>
      %38 = arith.mulf %36, %37 : vector<1x32xf32>
      %39 = arith.mulf %35, %35 : vector<1x32xf32>
      %40 = arith.subf %38, %39 : vector<1x32xf32>
      %cst_28 = arith.constant 0.000000e+00 : f32
      %41 = vector.broadcast %cst_28 : f32 to vector<1x32xf32>
      %42 = arith.maximumf %40, %41 : vector<1x32xf32>
      %cst_29 = arith.constant 9.99999974E-6 : f32
      %43 = vector.broadcast %cst_29 : f32 to vector<1x32xf32>
      %44 = arith.addf %42, %43 : vector<1x32xf32>
      %45 = math.rsqrt %44 : vector<1x32xf32>
      %c0_30 = arith.constant 0 : index
      %c0_31 = arith.constant 0 : index
      %46 = vector.load %arg11[%c0_30, %c0_31] : memref<256x32xf32, #tpu.memory_space<vmem>>, vector<256x32xf32>
      %47 = vector.broadcast %35 : vector<1x32xf32> to vector<256x32xf32>
      %48 = arith.subf %46, %47 : vector<256x32xf32>
      %49 = vector.broadcast %45 : vector<1x32xf32> to vector<256x32xf32>
      %50 = arith.mulf %48, %49 : vector<256x32xf32>
      %cst_32 = arith.constant 0.000000e+00 : f32
      %51 = vector.broadcast %cst_32 : f32 to vector<256x32xf32>
      %52 = arith.cmpf oge, %50, %51 : vector<256x32xf32>
      %cst_33 = arith.constant 0.00999999977 : f32
      %53 = vector.broadcast %cst_33 : f32 to vector<256x32xf32>
      %54 = arith.mulf %53, %50 : vector<256x32xf32>
      %55 = arith.select %52, %50, %54 : vector<256x32xi1>, vector<256x32xf32>
      %c0_34 = arith.constant 0 : index
      %c0_35 = arith.constant 0 : index
      %56 = vector.load %arg6[%c0_34, %c0_35] : memref<1x32xf32, #tpu.memory_space<vmem>>, vector<1x32xf32>
      %cst_36 = arith.constant dense<0.000000e+00> : vector<1x256xf32>
      %57 = tpu.matmul %56, %55, %cst_36 {dimension_numbers = #tpu.dot_dimension_numbers<[1], [1], [0], [0], [0, 0, 1, 0], [], []>} : vector<1x32xf32>, vector<256x32xf32>, vector<1x256xf32> -> vector<1x256xf32>
      %c0_37 = arith.constant 0 : index
      %c0_38 = arith.constant 0 : index
      %58 = memref.load %arg7[%c0_37, %c0_38] : memref<1x1xf32, #tpu.memory_space<smem>>
      %59 = vector.broadcast %58 : f32 to vector<1x256xf32>
      %60 = arith.addf %57, %59 : vector<1x256xf32>
      %cst_39 = arith.constant 0.000000e+00 : f32
      %61 = vector.broadcast %cst_39 : f32 to vector<1x256xf32>
      %62 = arith.maximumf %60, %61 : vector<1x256xf32>
      %63 = math.absf %60 : vector<1x256xf32>
      %cst_40 = arith.constant 0.000000e+00 : f32
      %64 = vector.broadcast %cst_40 : f32 to vector<1x256xf32>
      %65 = arith.subf %64, %63 : vector<1x256xf32>
      %66 = math.exp %65 : vector<1x256xf32>
      %cst_41 = arith.constant 1.000000e+00 : f32
      %67 = vector.broadcast %cst_41 : f32 to vector<1x256xf32>
      %68 = arith.addf %67, %66 : vector<1x256xf32>
      %69 = math.log %68 : vector<1x256xf32>
      %70 = arith.addf %62, %69 : vector<1x256xf32>
      %71 = arith.subf %60, %70 : vector<1x256xf32>
      %cst_42 = arith.constant -1.000000e+02 : f32
      %72 = vector.broadcast %cst_42 : f32 to vector<1x256xf32>
      %73 = arith.maximumf %71, %72 : vector<1x256xf32>
      %cst_43 = arith.constant 0.000000e+00 : f32
      %74 = vector.broadcast %cst_43 : f32 to vector<1x256xf32>
      %75 = arith.subf %74, %70 : vector<1x256xf32>
      %cst_44 = arith.constant -1.000000e+02 : f32
      %76 = vector.broadcast %cst_44 : f32 to vector<1x256xf32>
      %77 = arith.maximumf %75, %76 : vector<1x256xf32>
      %c0_45 = arith.constant 0 : index
      %c0_46 = arith.constant 0 : index
      %78 = vector.load %arg3[%c0_45, %c0_46] : memref<1x256xf32, #tpu.memory_space<vmem>>, vector<1x256xf32>
      %79 = arith.mulf %78, %73 : vector<1x256xf32>
      %cst_47 = arith.constant 1.000000e+00 : f32
      %80 = vector.broadcast %cst_47 : f32 to vector<1x256xf32>
      %81 = arith.subf %80, %78 : vector<1x256xf32>
      %82 = arith.mulf %81, %77 : vector<1x256xf32>
      %83 = arith.addf %79, %82 : vector<1x256xf32>
      %cst_48 = arith.constant dense<0.000000e+00> : vector<1xf32>
      %84 = vector.multi_reduction <add>, %83, %cst_48 [1] : vector<1x256xf32> to vector<1xf32>
      %85 = vector.shape_cast %84 : vector<1xf32> to vector<1x1xf32>
      %cst_49 = arith.constant 3.906250e-03 : f32
      %86 = vector.broadcast %cst_49 : f32 to vector<1x1xf32>
      %87 = arith.mulf %85, %86 : vector<1x1xf32>
      %cst_50 = arith.constant 0.000000e+00 : f32
      %88 = vector.broadcast %cst_50 : f32 to vector<1x1xf32>
      %89 = arith.subf %88, %87 : vector<1x1xf32>
      %c0_51 = arith.constant 0 : index
      %c0_52 = arith.constant 0 : index
      %90 = vector.load %arg8[%c0_51, %c0_52] : memref<1x1xf32, #tpu.memory_space<vmem>>, vector<1x1xf32>
      tpu.vector_store %arg8[%c0_51, %c0_52], %89 {strides = array<i32>} : memref<1x1xf32, #tpu.memory_space<vmem>>, vector<1x1xf32>,
    } else {
    }
    return
  }
  func.func @transform_0(%arg0: i32) -> (i32, i32) {
    %c0_i32 = arith.constant 0 : i32
    %c0_i32_0 = arith.constant 0 : i32
    return %arg0, %c0_i32 : i32, i32
  }
  func.func @transform_1(%arg0: i32) -> (i32, i32) {
    %c0_i32 = arith.constant 0 : i32
    %c0_i32_0 = arith.constant 0 : i32
    return %arg0, %c0_i32 : i32, i32
  }
  func.func @transform_2(%arg0: i32) -> (i32, i32) {
    %c0_i32 = arith.constant 0 : i32
    %c0_i32_0 = arith.constant 0 : i32
    %c0_i32_1 = arith.constant 0 : i32
    return %c0_i32, %c0_i32_0 : i32, i32
  }
  func.func @transform_3(%arg0: i32) -> (i32, i32) {
    %c0_i32 = arith.constant 0 : i32
    %c0_i32_0 = arith.constant 0 : i32
    %c0_i32_1 = arith.constant 0 : i32
    return %c0_i32, %c0_i32_0 : i32, i32
  }
  func.func @transform_4(%arg0: i32) -> (i32, i32) {
    %c0_i32 = arith.constant 0 : i32
    %c0_i32_0 = arith.constant 0 : i32
    %c0_i32_1 = arith.constant 0 : i32
    return %c0_i32, %c0_i32_0 : i32, i32
  }
  func.func @transform_5(%arg0: i32) -> (i32, i32) {
    %c0_i32 = arith.constant 0 : i32
    %c0_i32_0 = arith.constant 0 : i32
    %c0_i32_1 = arith.constant 0 : i32
    return %c0_i32, %c0_i32_0 : i32, i32
  }
  func.func @transform_6(%arg0: i32) -> (i32, i32) {
    %c0_i32 = arith.constant 0 : i32
    %c0_i32_0 = arith.constant 0 : i32
    %c0_i32_1 = arith.constant 0 : i32
    return %c0_i32, %c0_i32_0 : i32, i32
  }
  func.func @transform_7(%arg0: i32) -> (i32, i32) {
    %c0_i32 = arith.constant 0 : i32
    %c0_i32_0 = arith.constant 0 : i32
    %c0_i32_1 = arith.constant 0 : i32
    return %c0_i32, %c0_i32_0 : i32, i32
  }
}

</mosaic_0001>

<llo_original>
// kernel: tpu_custom_call.1
$region0: #{tpu_custom_call.1}
  #allocation0 [shape = 'u32[]', space=smem, size = 0x4, offset = 0x4, fixed_abs, tag = 'smem constant byte address 0x4 - core index']
  #allocation1 [shape = 'u32[144,128]{1,0:T(1,128)}', space=vmem, size = 0x12000, scoped, tag = 'internal scratch']
  #allocation2 [shape = 'f32[1,32]{1,0:T(1,128)}', space=vmem, size = 0x200, scoped, tag = 'scratch operand']
  #allocation3 [shape = 'f32[1,32]{1,0:T(1,128)}', space=vmem, size = 0x200, scoped, tag = 'scratch operand']
  #allocation4 [shape = 'f32[256,32]{1,0:T(8,128)}', space=vmem, size = 0x20000, scoped, tag = 'scratch operand']
  #allocation5 [shape = 'f32[1,1]{1,0:T(1,128)S(6)}', space=smem, size = 0x200, scoped, tag = 'scoped memory for tpu_custom_call.1']
  %s0 = inlined_call_operand.vmem [shape: f32[256,16], index: 0, kind: input, shape index: {}]
  %s1 = inlined_call_operand.vmem [shape: s32[256,1], index: 1, kind: input, shape index: {}]
  %s2 = inlined_call_operand.vmem [shape: f32[1,256], index: 2, kind: input, shape index: {}]
  %s3 = inlined_call_operand.vmem [shape: f32[16,32], index: 3, kind: input, shape index: {}]
  %s4 = inlined_call_operand.vmem [shape: f32[10,32], index: 4, kind: input, shape index: {}]
  %s5 = inlined_call_operand.vmem [shape: f32[1,32], index: 5, kind: input, shape index: {}]
  %s6 = inlined_call_operand.<no memory space> [shape: f32[1,1], index: 6, kind: input, shape index: {}]
  %s7 = inlined_call_operand.hbm [shape: f32[1,1], index: 7, kind: output, shape index: {}]
  %s8 = sld [smem:[#allocation0]]
  $region46: #{tpu_custom_call.1} parent=0
    _
  %s10 = ssub.s32 1, %s8
  %s11 = scalar_select 0, %s10, %s8
  %12 = sst [smem:[#allocation5]] %s6
  $region1: #{tpu_custom_call.1} parent=0
    #allocation6 [shape = 'u8[512]{0}', space=vmem, size = 0x400, scoped, tag = 'output window, operand 0, single buffered']
    #allocation7 [shape = 's32[1]{0}', space=sflag, size = 0x4, scoped, tag = 'scoped memory for tpu_custom_call.1']
    %13 = vsyncpa [#allocation7], 0
    // Predicated region
    $region2: #{tpu_custom_call.1} parent=1 // pred_check
      _
    $region3: #{tpu_custom_call.1} parent=1 // pred_check_branch
      %15 = sbr.rel (0) target = $region5
    $region4: #{tpu_custom_call.1} parent=1 // pred_region
      _
    $region5: #{tpu_custom_call.1} parent=1 // pred_fallthru
      _
    // Predicated region
    $region6: #{tpu_custom_call.1} parent=1 // pred_check
      _
    $region7: #{tpu_custom_call.1} parent=1 // pred_check_branch
      %17 = sbr.rel (0) target = $region9
    $region8: #{tpu_custom_call.1} parent=1 // pred_region
      _
    $region9: #{tpu_custom_call.1} parent=1 // pred_fallthru
      _
    // Predicated region
    $region10: #{tpu_custom_call.1} parent=1 // pred_check
      _
    $region11: #{tpu_custom_call.1} parent=1 // pred_check_branch
      %19 = sbr.rel (0) target = $region13
    $region12: #{tpu_custom_call.1} parent=1 // pred_region
      _
    $region13: #{tpu_custom_call.1} parent=1 // pred_fallthru
      _
    // Predicated region
    $region14: #{tpu_custom_call.1} parent=1 // pred_check
      _
    $region15: #{tpu_custom_call.1} parent=1 // pred_check_branch
      %21 = sbr.rel (0) target = $region17
    $region16: #{tpu_custom_call.1} parent=1 // pred_region
      _
    $region17: #{tpu_custom_call.1} parent=1 // pred_fallthru
      _
    // Predicated region
    $region18: #{tpu_custom_call.1} parent=1 // pred_check
      _
    $region19: #{tpu_custom_call.1} parent=1 // pred_check_branch
      %23 = sbr.rel (0) target = $region21
    $region20: #{tpu_custom_call.1} parent=1 // pred_region
      _
    $region21: #{tpu_custom_call.1} parent=1 // pred_fallthru
      _
    // Predicated region
    $region22: #{tpu_custom_call.1} parent=1 // pred_check
      _
    $region23: #{tpu_custom_call.1} parent=1 // pred_check_branch
      %25 = sbr.rel (0) target = $region25
    $region24: #{tpu_custom_call.1} parent=1 // pred_region
      _
    $region25: #{tpu_custom_call.1} parent=1 // pred_fallthru
      _
    // Predicated region
    $region26: #{tpu_custom_call.1} parent=1 // pred_check
      _
    $region27: #{tpu_custom_call.1} parent=1 // pred_check_branch
      %27 = sbr.rel (0) target = $region29
    $region28: #{tpu_custom_call.1} parent=1 // pred_region
      _
    $region29: #{tpu_custom_call.1} parent=1 // pred_fallthru
      _
    %p28 = scmp.eq.s32.totalorder 0, 0
    // Predicated region
    $region30: #{tpu_custom_call.1} parent=1 // pred_check
      %p29 = pneg %p28
    $region31: #{tpu_custom_call.1} parent=1 // pred_check_branch
      %31 = sbr.rel (%p29) target = $region33
    $region32: #{tpu_custom_call.1} parent=1 // pred_region
      %vm32 = vcmask 253952
      %33 = vst.msk [vmem:[#allocation2] sm:$0x1] %vm32, 0.0
      %34 = vst.msk [vmem:[#allocation3] sm:$0x1] %vm32, 0.0
    $region33: #{tpu_custom_call.1} parent=1 // pred_fallthru
      _
    %v35 = vld [vmem:[%s0] sm:$0xff]
    %v36 = vld [vmem:[%s0 + $0x8] sm:$0xff]
    %v37 = vld [vmem:[%s0 + $0x10] sm:$0xff]
    %v38 = vld [vmem:[%s0 + $0x18] sm:$0xff]
    %v39 = vld [vmem:[%s0 + $0x20] sm:$0xff]
    %v40 = vld [vmem:[%s0 + $0x28] sm:$0xff]
    %v41 = vld [vmem:[%s0 + $0x30] sm:$0xff]
    %v42 = vld [vmem:[%s0 + $0x38] sm:$0xff]
    %v43 = vld [vmem:[%s0 + $0x40] sm:$0xff]
    %v44 = vld [vmem:[%s0 + $0x48] sm:$0xff]
    %v45 = vld [vmem:[%s0 + $0x50] sm:$0xff]
    %v46 = vld [vmem:[%s0 + $0x58] sm:$0xff]
    %v47 = vld [vmem:[%s0 + $0x60] sm:$0xff]
    %v48 = vld [vmem:[%s0 + $0x68] sm:$0xff]
    %v49 = vld [vmem:[%s0 + $0x70] sm:$0xff]
    %v50 = vld [vmem:[%s0 + $0x78] sm:$0xff]
    %v51 = vld [vmem:[%s0 + $0x80] sm:$0xff]
    %v52 = vld [vmem:[%s0 + $0x88] sm:$0xff]
    %v53 = vld [vmem:[%s0 + $0x90] sm:$0xff]
    %v54 = vld [vmem:[%s0 + $0x98] sm:$0xff]
    %v55 = vld [vmem:[%s0 + $0xa0] sm:$0xff]
    %v56 = vld [vmem:[%s0 + $0xa8] sm:$0xff]
    %v57 = vld [vmem:[%s0 + $0xb0] sm:$0xff]
    %v58 = vld [vmem:[%s0 + $0xb8] sm:$0xff]
    %v59 = vld [vmem:[%s0 + $0xc0] sm:$0xff]
    %v60 = vld [vmem:[%s0 + $0xc8] sm:$0xff]
    %v61 = vld [vmem:[%s0 + $0xd0] sm:$0xff]
    %v62 = vld [vmem:[%s0 + $0xd8] sm:$0xff]
    %v63 = vld [vmem:[%s0 + $0xe0] sm:$0xff]
    %v64 = vld [vmem:[%s0 + $0xe8] sm:$0xff]
    %v65 = vld [vmem:[%s0 + $0xf0] sm:$0xff]
    %v66 = vld [vmem:[%s0 + $0xf8] sm:$0xff]
    %v67 = vlaneseq
    %v68 = vand.u32 %v67, 127
    %v69 = vld [vmem:[%s1] sm:$0xff]
    %v70 = vld [vmem:[%s1 + $0x8] sm:$0xff]
    %v71 = vld [vmem:[%s1 + $0x10] sm:$0xff]
    %v72 = vld [vmem:[%s1 + $0x18] sm:$0xff]
    %v73 = vld [vmem:[%s1 + $0x20] sm:$0xff]
    %v74 = vld [vmem:[%s1 + $0x28] sm:$0xff]
    %v75 = vld [vmem:[%s1 + $0x30] sm:$0xff]
    %v76 = vld [vmem:[%s1 + $0x38] sm:$0xff]
    %v77 = vld [vmem:[%s1 + $0x40] sm:$0xff]
    %v78 = vld [vmem:[%s1 + $0x48] sm:$0xff]
    %v79 = vld [vmem:[%s1 + $0x50] sm:$0xff]
    %v80 = vld [vmem:[%s1 + $0x58] sm:$0xff]
    %v81 = vld [vmem:[%s1 + $0x60] sm:$0xff]
    %v82 = vld [vmem:[%s1 + $0x68] sm:$0xff]
    %v83 = vld [vmem:[%s1 + $0x70] sm:$0xff]
    %v84 = vld [vmem:[%s1 + $0x78] sm:$0xff]
    %v85 = vld [vmem:[%s1 + $0x80] sm:$0xff]
    %v86 = vld [vmem:[%s1 + $0x88] sm:$0xff]
    %v87 = vld [vmem:[%s1 + $0x90] sm:$0xff]
    %v88 = vld [vmem:[%s1 + $0x98] sm:$0xff]
    %v89 = vld [vmem:[%s1 + $0xa0] sm:$0xff]
    %v90 = vld [vmem:[%s1 + $0xa8] sm:$0xff]
    %v91 = vld [vmem:[%s1 + $0xb0] sm:$0xff]
    %v92 = vld [vmem:[%s1 + $0xb8] sm:$0xff]
    %v93 = vld [vmem:[%s1 + $0xc0] sm:$0xff]
    %v94 = vld [vmem:[%s1 + $0xc8] sm:$0xff]
    %v95 = vld [vmem:[%s1 + $0xd0] sm:$0xff]
    %v96 = vld [vmem:[%s1 + $0xd8] sm:$0xff]
    %v97 = vld [vmem:[%s1 + $0xe0] sm:$0xff]
    %v98 = vld [vmem:[%s1 + $0xe8] sm:$0xff]
    %v99 = vld [vmem:[%s1 + $0xf0] sm:$0xff]
    %v100 = vld [vmem:[%s1 + $0xf8] sm:$0xff]
    %101 = vset.pattern.permute.xlu0 0
    %102 = vperm.xlu0 %101, %v69
    %v103 = vpop.permute.xlu0 %102
    %104 = vset.pattern.permute.xlu0 0
    %105 = vperm.xlu0 %104, %v70
    %v106 = vpop.permute.xlu0 %105
    %107 = vset.pattern.permute.xlu0 0
    %108 = vperm.xlu0 %107, %v71
    %v109 = vpop.permute.xlu0 %108
    %110 = vset.pattern.permute.xlu0 0
    %111 = vperm.xlu0 %110, %v72
    %v112 = vpop.permute.xlu0 %111
    %113 = vset.pattern.permute.xlu0 0
    %114 = vperm.xlu0 %113, %v73
    %v115 = vpop.permute.xlu0 %114
    %116 = vset.pattern.permute.xlu0 0
    %117 = vperm.xlu0 %116, %v74
    %v118 = vpop.permute.xlu0 %117
    %119 = vset.pattern.permute.xlu0 0
    %120 = vperm.xlu0 %119, %v75
    %v121 = vpop.permute.xlu0 %120
    %122 = vset.pattern.permute.xlu0 0
    %123 = vperm.xlu0 %122, %v76
    %v124 = vpop.permute.xlu0 %123
    %125 = vset.pattern.permute.xlu0 0
    %126 = vperm.xlu0 %125, %v77
    %v127 = vpop.permute.xlu0 %126
    %128 = vset.pattern.permute.xlu0 0
    %129 = vperm.xlu0 %128, %v78
    %v130 = vpop.permute.xlu0 %129
    %131 = vset.pattern.permute.xlu0 0
    %132 = vperm.xlu0 %131, %v79
    %v133 = vpop.permute.xlu0 %132
    %134 = vset.pattern.permute.xlu0 0
    %135 = vperm.xlu0 %134, %v80
    %v136 = vpop.permute.xlu0 %135
    %137 = vset.pattern.permute.xlu0 0
    %138 = vperm.xlu0 %137, %v81
    %v139 = vpop.permute.xlu0 %138
    %140 = vset.pattern.permute.xlu0 0
    %141 = vperm.xlu0 %140, %v82
    %v142 = vpop.permute.xlu0 %141
    %143 = vset.pattern.permute.xlu0 0
    %144 = vperm.xlu0 %143, %v83
    %v145 = vpop.permute.xlu0 %144
    %146 = vset.pattern.permute.xlu0 0
    %147 = vperm.xlu0 %146, %v84
    %v148 = vpop.permute.xlu0 %147
    %149 = vset.pattern.permute.xlu0 0
    %150 = vperm.xlu0 %149, %v85
    %v151 = vpop.permute.xlu0 %150
    %152 = vset.pattern.permute.xlu0 0
    %153 = vperm.xlu0 %152, %v86
    %v154 = vpop.permute.xlu0 %153
    %155 = vset.pattern.permute.xlu0 0
    %156 = vperm.xlu0 %155, %v87
    %v157 = vpop.permute.xlu0 %156
    %158 = vset.pattern.permute.xlu0 0
    %159 = vperm.xlu0 %158, %v88
    %v160 = vpop.permute.xlu0 %159
    %161 = vset.pattern.permute.xlu0 0
    %162 = vperm.xlu0 %161, %v89
    %v163 = vpop.permute.xlu0 %162
    %164 = vset.pattern.permute.xlu0 0
    %165 = vperm.xlu0 %164, %v90
    %v166 = vpop.permute.xlu0 %165
    %167 = vset.pattern.permute.xlu0 0
    %168 = vperm.xlu0 %167, %v91
    %v169 = vpop.permute.xlu0 %168
    %170 = vset.pattern.permute.xlu0 0
    %171 = vperm.xlu0 %170, %v92
    %v172 = vpop.permute.xlu0 %171
    %173 = vset.pattern.permute.xlu0 0
    %174 = vperm.xlu0 %173, %v93
    %v175 = vpop.permute.xlu0 %174
    %176 = vset.pattern.permute.xlu0 0
    %177 = vperm.xlu0 %176, %v94
    %v178 = vpop.permute.xlu0 %177
    %179 = vset.pattern.permute.xlu0 0
    %180 = vperm.xlu0 %179, %v95
    %v181 = vpop.permute.xlu0 %180
    %182 = vset.pattern.permute.xlu0 0
    %183 = vperm.xlu0 %182, %v96
    %v184 = vpop.permute.xlu0 %183
    %185 = vset.pattern.permute.xlu0 0
    %186 = vperm.xlu0 %185, %v97
    %v187 = vpop.permute.xlu0 %186
    %188 = vset.pattern.permute.xlu0 0
    %189 = vperm.xlu0 %188, %v98
    %v190 = vpop.permute.xlu0 %189
    %191 = vset.pattern.permute.xlu0 0
    %192 = vperm.xlu0 %191, %v99
    %v193 = vpop.permute.xlu0 %192
    %194 = vset.pattern.permute.xlu0 0
    %195 = vperm.xlu0 %194, %v100
    %v196 = vpop.permute.xlu0 %195
    %vm197 = vcmp.eq.s32.totalorder %v68, %v103
    %vm198 = vcmp.eq.s32.totalorder %v68, %v106
    %vm199 = vcmp.eq.s32.totalorder %v68, %v109
    %vm200 = vcmp.eq.s32.totalorder %v68, %v112
    %vm201 = vcmp.eq.s32.totalorder %v68, %v115
    %vm202 = vcmp.eq.s32.totalorder %v68, %v118
    %vm203 = vcmp.eq.s32.totalorder %v68, %v121
    %vm204 = vcmp.eq.s32.totalorder %v68, %v124
    %vm205 = vcmp.eq.s32.totalorder %v68, %v127
    %vm206 = vcmp.eq.s32.totalorder %v68, %v130
    %vm207 = vcmp.eq.s32.totalorder %v68, %v133
    %vm208 = vcmp.eq.s32.totalorder %v68, %v136
    %vm209 = vcmp.eq.s32.totalorder %v68, %v139
    %vm210 = vcmp.eq.s32.totalorder %v68, %v142
    %vm211 = vcmp.eq.s32.totalorder %v68, %v145
    %vm212 = vcmp.eq.s32.totalorder %v68, %v148
    %vm213 = vcmp.eq.s32.totalorder %v68, %v151
    %vm214 = vcmp.eq.s32.totalorder %v68, %v154
    %vm215 = vcmp.eq.s32.totalorder %v68, %v157
    %vm216 = vcmp.eq.s32.totalorder %v68, %v160
    %vm217 = vcmp.eq.s32.totalorder %v68, %v163
    %vm218 = vcmp.eq.s32.totalorder %v68, %v166
    %vm219 = vcmp.eq.s32.totalorder %v68, %v169
    %vm220 = vcmp.eq.s32.totalorder %v68, %v172
    %vm221 = vcmp.eq.s32.totalorder %v68, %v175
    %vm222 = vcmp.eq.s32.totalorder %v68, %v178
    %vm223 = vcmp.eq.s32.totalorder %v68, %v181
    %vm224 = vcmp.eq.s32.totalorder %v68, %v184
    %vm225 = vcmp.eq.s32.totalorder %v68, %v187
    %vm226 = vcmp.eq.s32.totalorder %v68, %v190
    %vm227 = vcmp.eq.s32.totalorder %v68, %v193
    %vm228 = vcmp.eq.s32.totalorder %v68, %v196
    %v229 = vsel %vm197, 1, 0
    %v230 = vsel %vm198, 1, 0
    %v231 = vsel %vm199, 1, 0
    %v232 = vsel %vm200, 1, 0
    %v233 = vsel %vm201, 1, 0
    %v234 = vsel %vm202, 1, 0
    %v235 = vsel %vm203, 1, 0
    %v236 = vsel %vm204, 1, 0
    %v237 = vsel %vm205, 1, 0
    %v238 = vsel %vm206, 1, 0
    %v239 = vsel %vm207, 1, 0
    %v240 = vsel %vm208, 1, 0
    %v241 = vsel %vm209, 1, 0
    %v242 = vsel %vm210, 1, 0
    %v243 = vsel %vm211, 1, 0
    %v244 = vsel %vm212, 1, 0
    %v245 = vsel %vm213, 1, 0
    %v246 = vsel %vm214, 1, 0
    %v247 = vsel %vm215, 1, 0
    %v248 = vsel %vm216, 1, 0
    %v249 = vsel %vm217, 1, 0
    %v250 = vsel %vm218, 1, 0
    %v251 = vsel %vm219, 1, 0
    %v252 = vsel %vm220, 1, 0
    %v253 = vsel %vm221, 1, 0
    %v254 = vsel %vm222, 1, 0
    %v255 = vsel %vm223, 1, 0
    %v256 = vsel %vm224, 1, 0
    %v257 = vsel %vm225, 1, 0
    %v258 = vsel %vm226, 1, 0
    %v259 = vsel %vm227, 1, 0
    %v260 = vsel %vm228, 1, 0
    %v261 = vcvt.s32.f32 %v229
    %v262 = vcvt.s32.f32 %v230
    %v263 = vcvt.s32.f32 %v231
    %v264 = vcvt.s32.f32 %v232
    %v265 = vcvt.s32.f32 %v233
    %v266 = vcvt.s32.f32 %v234
    %v267 = vcvt.s32.f32 %v235
    %v268 = vcvt.s32.f32 %v236
    %v269 = vcvt.s32.f32 %v237
    %v270 = vcvt.s32.f32 %v238
    %v271 = vcvt.s32.f32 %v239
    %v272 = vcvt.s32.f32 %v240
    %v273 = vcvt.s32.f32 %v241
    %v274 = vcvt.s32.f32 %v242
    %v275 = vcvt.s32.f32 %v243
    %v276 = vcvt.s32.f32 %v244
    %v277 = vcvt.s32.f32 %v245
    %v278 = vcvt.s32.f32 %v246
    %v279 = vcvt.s32.f32 %v247
    %v280 = vcvt.s32.f32 %v248
    %v281 = vcvt.s32.f32 %v249
    %v282 = vcvt.s32.f32 %v250
    %v283 = vcvt.s32.f32 %v251
    %v284 = vcvt.s32.f32 %v252
    %v285 = vcvt.s32.f32 %v253
    %v286 = vcvt.s32.f32 %v254
    %v287 = vcvt.s32.f32 %v255
    %v288 = vcvt.s32.f32 %v256
    %v289 = vcvt.s32.f32 %v257
    %v290 = vcvt.s32.f32 %v258
    %v291 = vcvt.s32.f32 %v259
    %v292 = vcvt.s32.f32 %v260
    %v293 = vld [vmem:[%s3] sm:$0xff]
    %v294 = vld [vmem:[%s3 + $0x8] sm:$0xff]
    %v295 = vld [vmem:[%s4] sm:$0xff]
    %v296 = vld [vmem:[%s4 + $0x8] sm:$0x3]
    %vm297 = vcmask 80896
    %v299 = vsel %vm297, %v261, 0
    %v302 = vsel %vm297, %v262, 0
    %v305 = vsel %vm297, %v263, 0
    %v308 = vsel %vm297, %v264, 0
    %v311 = vsel %vm297, %v265, 0
    %v314 = vsel %vm297, %v266, 0
    %v317 = vsel %vm297, %v267, 0
    %v320 = vsel %vm297, %v268, 0
    %v323 = vsel %vm297, %v269, 0
    %v326 = vsel %vm297, %v270, 0
    %v329 = vsel %vm297, %v271, 0
    %v332 = vsel %vm297, %v272, 0
    %v335 = vsel %vm297, %v273, 0
    %v338 = vsel %vm297, %v274, 0
    %v341 = vsel %vm297, %v275, 0
    %v344 = vsel %vm297, %v276, 0
    %v347 = vsel %vm297, %v277, 0
    %v350 = vsel %vm297, %v278, 0
    %v353 = vsel %vm297, %v279, 0
    %v356 = vsel %vm297, %v280, 0
    %v359 = vsel %vm297, %v281, 0
    %v362 = vsel %vm297, %v282, 0
    %v365 = vsel %vm297, %v283, 0
    %v368 = vsel %vm297, %v284, 0
    %v371 = vsel %vm297, %v285, 0
    %v374 = vsel %vm297, %v286, 0
    %v377 = vsel %vm297, %v287, 0
    %v380 = vsel %vm297, %v288, 0
    %v383 = vsel %vm297, %v289, 0
    %v386 = vsel %vm297, %v290, 0
    %v389 = vsel %vm297, %v291, 0
    %v392 = vsel %vm297, %v292, 0
    %vm394 = vcmask 1041408
    %v396 = vsel %vm394, %v296, 0
    %398 = vmatprep.subr.mxu0 0.0
    %399 = vmatpush1.msra.mxu0 0.0
    %400 = vmatprep.subr.mxu0 0.0
    %401 = vmatpush1.msra.mxu0 0.0
    %402 = vmatprep.subr.mxu0 0.0
    %403 = vmatpush1.msra.mxu0 0.0
    %404 = vmatprep.subr.mxu0 0.0
    %405 = vmatpush1.msra.mxu0 0.0
    %406 = vmatprep.subr.mxu0 0.0
    %407 = vmatpush1.msra.mxu0 0.0
    %408 = vmatprep.subr.mxu0 0.0
    %409 = vmatpush1.msra.mxu0 0.0
    %410 = vmatprep.subr.mxu0 0.0
    %411 = vmatpush1.msra.mxu0 0.0
    %412 = vmatprep.subr.mxu0 0.0
    %413 = vmatpush1.msra.mxu0 0.0
    %414 = vmatprep.subr.mxu0 0.0
    %415 = vmatpush1.msra.mxu0 0.0
    %416 = vmatprep.subr.mxu0 0.0
    %417 = vmatpush1.msra.mxu0 0.0
    %418 = vmatprep.subr.mxu0 0.0
    %419 = vmatpush1.msra.mxu0 0.0
    %420 = vmatprep.subr.mxu0 0.0
    %421 = vmatpush1.msra.mxu0 0.0
    %422 = vmatprep.subr.mxu0 0.0
    %423 = vmatpush1.msra.mxu0 0.0
    %424 = vmatprep.subr.mxu0 0.0
    %425 = vmatpush1.msra.mxu0 0.0
    %426 = vmatprep.subr.mxu0 0.0
    %427 = vmatpush1.msra.mxu0 %v396
    %428 = vmatprep.subr.mxu0 0.0
    %429 = vmatpush1.msra.mxu0 %v295
    %430 = vmatprep.subr.mxu0 0.0
    %431 = vmatpush2.msra.mxu0 0.0
    %432 = vmatprep.subr.mxu0 0.0
    %433 = vmatpush2.msra.mxu0 0.0
    %434 = vmatprep.subr.mxu0 0.0
    %435 = vmatpush2.msra.mxu0 0.0
    %436 = vmatprep.subr.mxu0 0.0
    %437 = vmatpush2.msra.mxu0 0.0
    %438 = vmatprep.subr.mxu0 0.0
    %439 = vmatpush2.msra.mxu0 0.0
    %440 = vmatprep.subr.mxu0 0.0
    %441 = vmatpush2.msra.mxu0 0.0
    %442 = vmatprep.subr.mxu0 0.0
    %443 = vmatpush2.msra.mxu0 0.0
    %444 = vmatprep.subr.mxu0 0.0
    %445 = vmatpush2.msra.mxu0 0.0
    %446 = vmatprep.subr.mxu0 0.0
    %447 = vmatpush2.msra.mxu0 0.0
    %448 = vmatprep.subr.mxu0 0.0
    %449 = vmatpush2.msra.mxu0 0.0
    %450 = vmatprep.subr.mxu0 0.0
    %451 = vmatpush2.msra.mxu0 0.0
    %452 = vmatprep.subr.mxu0 0.0
    %453 = vmatpush2.msra.mxu0 0.0
    %454 = vmatprep.subr.mxu0 0.0
    %455 = vmatpush2.msra.mxu0 0.0
    %456 = vmatprep.subr.mxu0 0.0
    %457 = vmatpush2.msra.mxu0 0.0
    %458 = vmatprep.subr.mxu0 0.0
    %459 = vmatpush2.msra.mxu0 0.0
    %460 = vmatprep.subr.mxu0 0.0
    %461 = vmatpush2.msra.mxu0 0.0
    %462 = vmatprep.mubr.f32.mxu0 0.0
    %463 = vmatmul.mubr.f32.gmra.mxu0 %v299
    %v464 = vpop.f32.mrf.mxu0
    %v465 = vadd.f32 0.0, %v464
    %v466 = vpop.f32.mrf.mxu0
    %467 = vmatprep.mubr.f32.mxu0 0.0
    %468 = vmatmul.mubr.f32.gmra.mxu0 %v302
    %v469 = vpop.f32.mrf.mxu0
    %v470 = vadd.f32 0.0, %v469
    %v471 = vpop.f32.mrf.mxu0
    %472 = vmatprep.mubr.f32.mxu0 0.0
    %473 = vmatmul.mubr.f32.gmra.mxu0 %v305
    %v474 = vpop.f32.mrf.mxu0
    %v475 = vadd.f32 0.0, %v474
    %v476 = vpop.f32.mrf.mxu0
    %477 = vmatprep.mubr.f32.mxu0 0.0
    %478 = vmatmul.mubr.f32.gmra.mxu0 %v308
    %v479 = vpop.f32.mrf.mxu0
    %v480 = vadd.f32 0.0, %v479
    %v481 = vpop.f32.mrf.mxu0
    %482 = vmatprep.mubr.f32.mxu0 0.0
    %483 = vmatmul.mubr.f32.gmra.mxu0 %v311
    %v484 = vpop.f32.mrf.mxu0
    %v485 = vadd.f32 0.0, %v484
    %v486 = vpop.f32.mrf.mxu0
    %487 = vmatprep.mubr.f32.mxu0 0.0
    %488 = vmatmul.mubr.f32.gmra.mxu0 %v314
    %v489 = vpop.f32.mrf.mxu0
    %v490 = vadd.f32 0.0, %v489
    %v491 = vpop.f32.mrf.mxu0
    %492 = vmatprep.mubr.f32.mxu0 0.0
    %493 = vmatmul.mubr.f32.gmra.mxu0 %v317
    %v494 = vpop.f32.mrf.mxu0
    %v495 = vadd.f32 0.0, %v494
    %v496 = vpop.f32.mrf.mxu0
    %497 = vmatprep.mubr.f32.mxu0 0.0
    %498 = vmatmul.mubr.f32.gmra.mxu0 %v320
    %v499 = vpop.f32.mrf.mxu0
    %v500 = vadd.f32 0.0, %v499
    %v501 = vpop.f32.mrf.mxu0
    %502 = vmatprep.mubr.f32.mxu0 0.0
    %503 = vmatmul.mubr.f32.gmra.mxu0 %v323
    %v504 = vpop.f32.mrf.mxu0
    %v505 = vadd.f32 0.0, %v504
    %v506 = vpop.f32.mrf.mxu0
    %507 = vmatprep.mubr.f32.mxu0 0.0
    %508 = vmatmul.mubr.f32.gmra.mxu0 %v326
    %v509 = vpop.f32.mrf.mxu0
    %v510 = vadd.f32 0.0, %v509
    %v511 = vpop.f32.mrf.mxu0
    %512 = vmatprep.mubr.f32.mxu0 0.0
    %513 = vmatmul.mubr.f32.gmra.mxu0 %v329
    %v514 = vpop.f32.mrf.mxu0
    %v515 = vadd.f32 0.0, %v514
    %v516 = vpop.f32.mrf.mxu0
    %517 = vmatprep.mubr.f32.mxu0 0.0
    %518 = vmatmul.mubr.f32.gmra.mxu0 %v332
    %v519 = vpop.f32.mrf.mxu0
    %v520 = vadd.f32 0.0, %v519
    %v521 = vpop.f32.mrf.mxu0
    %522 = vmatprep.mubr.f32.mxu0 0.0
    %523 = vmatmul.mubr.f32.gmra.mxu0 %v335
    %v524 = vpop.f32.mrf.mxu0
    %v525 = vadd.f32 0.0, %v524
    %v526 = vpop.f32.mrf.mxu0
    %527 = vmatprep.mubr.f32.mxu0 0.0
    %528 = vmatmul.mubr.f32.gmra.mxu0 %v338
    %v529 = vpop.f32.mrf.mxu0
    %v530 = vadd.f32 0.0, %v529
    %v531 = vpop.f32.mrf.mxu0
    %532 = vmatprep.mubr.f32.mxu0 0.0
    %533 = vmatmul.mubr.f32.gmra.mxu0 %v341
    %v534 = vpop.f32.mrf.mxu0
    %v535 = vadd.f32 0.0, %v534
    %v536 = vpop.f32.mrf.mxu0
    %537 = vmatprep.mubr.f32.mxu0 0.0
    %538 = vmatmul.mubr.f32.gmra.mxu0 %v344
    %v539 = vpop.f32.mrf.mxu0
    %v540 = vadd.f32 0.0, %v539
    %v541 = vpop.f32.mrf.mxu0
    %542 = vmatprep.mubr.f32.mxu0 0.0
    %543 = vmatmul.mubr.f32.gmra.mxu0 %v347
    %v544 = vpop.f32.mrf.mxu0
    %v545 = vadd.f32 0.0, %v544
    %v546 = vpop.f32.mrf.mxu0
    %547 = vmatprep.mubr.f32.mxu0 0.0
    %548 = vmatmul.mubr.f32.gmra.mxu0 %v350
    %v549 = vpop.f32.mrf.mxu0
    %v550 = vadd.f32 0.0, %v549
    %v551 = vpop.f32.mrf.mxu0
    %552 = vmatprep.mubr.f32.mxu0 0.0
    %553 = vmatmul.mubr.f32.gmra.mxu0 %v353
    %v554 = vpop.f32.mrf.mxu0
    %v555 = vadd.f32 0.0, %v554
    %v556 = vpop.f32.mrf.mxu0
    %557 = vmatprep.mubr.f32.mxu0 0.0
    %558 = vmatmul.mubr.f32.gmra.mxu0 %v356
    %v559 = vpop.f32.mrf.mxu0
    %v560 = vadd.f32 0.0, %v559
    %v561 = vpop.f32.mrf.mxu0
    %562 = vmatprep.mubr.f32.mxu0 0.0
    %563 = vmatmul.mubr.f32.gmra.mxu0 %v359
    %v564 = vpop.f32.mrf.mxu0
    %v565 = vadd.f32 0.0, %v564
    %v566 = vpop.f32.mrf.mxu0
    %567 = vmatprep.mubr.f32.mxu0 0.0
    %568 = vmatmul.mubr.f32.gmra.mxu0 %v362
    %v569 = vpop.f32.mrf.mxu0
    %v570 = vadd.f32 0.0, %v569
    %v571 = vpop.f32.mrf.mxu0
    %572 = vmatprep.mubr.f32.mxu0 0.0
    %573 = vmatmul.mubr.f32.gmra.mxu0 %v365
    %v574 = vpop.f32.mrf.mxu0
    %v575 = vadd.f32 0.0, %v574
    %v576 = vpop.f32.mrf.mxu0
    %577 = vmatprep.mubr.f32.mxu0 0.0
    %578 = vmatmul.mubr.f32.gmra.mxu0 %v368
    %v579 = vpop.f32.mrf.mxu0
    %v580 = vadd.f32 0.0, %v579
    %v581 = vpop.f32.mrf.mxu0
    %582 = vmatprep.mubr.f32.mxu0 0.0
    %583 = vmatmul.mubr.f32.gmra.mxu0 %v371
    %v584 = vpop.f32.mrf.mxu0
    %v585 = vadd.f32 0.0, %v584
    %v586 = vpop.f32.mrf.mxu0
    %587 = vmatprep.mubr.f32.mxu0 0.0
    %588 = vmatmul.mubr.f32.gmra.mxu0 %v374
    %v589 = vpop.f32.mrf.mxu0
    %v590 = vadd.f32 0.0, %v589
    %v591 = vpop.f32.mrf.mxu0
    %592 = vmatprep.mubr.f32.mxu0 0.0
    %593 = vmatmul.mubr.f32.gmra.mxu0 %v377
    %v594 = vpop.f32.mrf.mxu0
    %v595 = vadd.f32 0.0, %v594
    %v596 = vpop.f32.mrf.mxu0
    %597 = vmatprep.mubr.f32.mxu0 0.0
    %598 = vmatmul.mubr.f32.gmra.mxu0 %v380
    %v599 = vpop.f32.mrf.mxu0
    %v600 = vadd.f32 0.0, %v599
    %v601 = vpop.f32.mrf.mxu0
    %602 = vmatprep.mubr.f32.mxu0 0.0
    %603 = vmatmul.mubr.f32.gmra.mxu0 %v383
    %v604 = vpop.f32.mrf.mxu0
    %v605 = vadd.f32 0.0, %v604
    %v606 = vpop.f32.mrf.mxu0
    %607 = vmatprep.mubr.f32.mxu0 0.0
    %608 = vmatmul.mubr.f32.gmra.mxu0 %v386
    %v609 = vpop.f32.mrf.mxu0
    %v610 = vadd.f32 0.0, %v609
    %v611 = vpop.f32.mrf.mxu0
    %612 = vmatprep.mubr.f32.mxu0 0.0
    %613 = vmatmul.mubr.f32.gmra.mxu0 %v389
    %v614 = vpop.f32.mrf.mxu0
    %v615 = vadd.f32 0.0, %v614
    %v616 = vpop.f32.mrf.mxu0
    %617 = vmatprep.mubr.f32.mxu0 0.0
    %618 = vmatmul.mubr.f32.gmra.mxu0 %v392
    %v619 = vpop.f32.mrf.mxu0
    %v620 = vadd.f32 0.0, %v619
    %v621 = vpop.f32.mrf.mxu0
    %622 = vdwg.mxu0
    %vm623 = vcmask 130048
    %v625 = vsel %vm623, %v35, 0
    %v628 = vsel %vm623, %v36, 0
    %v631 = vsel %vm623, %v37, 0
    %v634 = vsel %vm623, %v38, 0
    %v637 = vsel %vm623, %v39, 0
    %v640 = vsel %vm623, %v40, 0
    %v643 = vsel %vm623, %v41, 0
    %v646 = vsel %vm623, %v42, 0
    %v649 = vsel %vm623, %v43, 0
    %v652 = vsel %vm623, %v44, 0
    %v655 = vsel %vm623, %v45, 0
    %v658 = vsel %vm623, %v46, 0
    %v661 = vsel %vm623, %v47, 0
    %v664 = vsel %vm623, %v48, 0
    %v667 = vsel %vm623, %v49, 0
    %v670 = vsel %vm623, %v50, 0
    %v673 = vsel %vm623, %v51, 0
    %v676 = vsel %vm623, %v52, 0
    %v679 = vsel %vm623, %v53, 0
    %v682 = vsel %vm623, %v54, 0
    %v685 = vsel %vm623, %v55, 0
    %v688 = vsel %vm623, %v56, 0
    %v691 = vsel %vm623, %v57, 0
    %v694 = vsel %vm623, %v58, 0
    %v697 = vsel %vm623, %v59, 0
    %v700 = vsel %vm623, %v60, 0
    %v703 = vsel %vm623, %v61, 0
    %v706 = vsel %vm623, %v62, 0
    %v709 = vsel %vm623, %v63, 0
    %v712 = vsel %vm623, %v64, 0
    %v715 = vsel %vm623, %v65, 0
    %v718 = vsel %vm623, %v66, 0
    %720 = vmatprep.subr.mxu0 0.0
    %721 = vmatpush1.msra.mxu0 0.0
    %722 = vmatprep.subr.mxu0 0.0
    %723 = vmatpush1.msra.mxu0 0.0
    %724 = vmatprep.subr.mxu0 0.0
    %725 = vmatpush1.msra.mxu0 0.0
    %726 = vmatprep.subr.mxu0 0.0
    %727 = vmatpush1.msra.mxu0 0.0
    %728 = vmatprep.subr.mxu0 0.0
    %729 = vmatpush1.msra.mxu0 0.0
    %730 = vmatprep.subr.mxu0 0.0
    %731 = vmatpush1.msra.mxu0 0.0
    %732 = vmatprep.subr.mxu0 0.0
    %733 = vmatpush1.msra.mxu0 0.0
    %734 = vmatprep.subr.mxu0 0.0
    %735 = vmatpush1.msra.mxu0 0.0
    %736 = vmatprep.subr.mxu0 0.0
    %737 = vmatpush1.msra.mxu0 0.0
    %738 = vmatprep.subr.mxu0 0.0
    %739 = vmatpush1.msra.mxu0 0.0
    %740 = vmatprep.subr.mxu0 0.0
    %741 = vmatpush1.msra.mxu0 0.0
    %742 = vmatprep.subr.mxu0 0.0
    %743 = vmatpush1.msra.mxu0 0.0
    %744 = vmatprep.subr.mxu0 0.0
    %745 = vmatpush1.msra.mxu0 0.0
    %746 = vmatprep.subr.mxu0 0.0
    %747 = vmatpush1.msra.mxu0 0.0
    %748 = vmatprep.subr.mxu0 0.0
    %749 = vmatpush1.msra.mxu0 %v294
    %750 = vmatprep.subr.mxu0 0.0
    %751 = vmatpush1.msra.mxu0 %v293
    %752 = vmatprep.subr.mxu0 0.0
    %753 = vmatpush2.msra.mxu0 0.0
    %754 = vmatprep.subr.mxu0 0.0
    %755 = vmatpush2.msra.mxu0 0.0
    %756 = vmatprep.subr.mxu0 0.0
    %757 = vmatpush2.msra.mxu0 0.0
    %758 = vmatprep.subr.mxu0 0.0
    %759 = vmatpush2.msra.mxu0 0.0
    %760 = vmatprep.subr.mxu0 0.0
    %761 = vmatpush2.msra.mxu0 0.0
    %762 = vmatprep.subr.mxu0 0.0
    %763 = vmatpush2.msra.mxu0 0.0
    %764 = vmatprep.subr.mxu0 0.0
    %765 = vmatpush2.msra.mxu0 0.0
    %766 = vmatprep.subr.mxu0 0.0
    %767 = vmatpush2.msra.mxu0 0.0
    %768 = vmatprep.subr.mxu0 0.0
    %769 = vmatpush2.msra.mxu0 0.0
    %770 = vmatprep.subr.mxu0 0.0
    %771 = vmatpush2.msra.mxu0 0.0
    %772 = vmatprep.subr.mxu0 0.0
    %773 = vmatpush2.msra.mxu0 0.0
    %774 = vmatprep.subr.mxu0 0.0
    %775 = vmatpush2.msra.mxu0 0.0
    %776 = vmatprep.subr.mxu0 0.0
    %777 = vmatpush2.msra.mxu0 0.0
    %778 = vmatprep.subr.mxu0 0.0
    %779 = vmatpush2.msra.mxu0 0.0
    %780 = vmatprep.subr.mxu0 0.0
    %781 = vmatpush2.msra.mxu0 0.0
    %782 = vmatprep.subr.mxu0 0.0
    %783 = vmatpush2.msra.mxu0 0.0
    %784 = vmatprep.mubr.f32.mxu0 0.0
    %785 = vmatmul.mubr.f32.gmra.mxu0 %v625
    %v786 = vpop.f32.mrf.mxu0
    %v787 = vadd.f32 %v465, %v786
    %v788 = vpop.f32.mrf.mxu0
    %789 = vmatprep.mubr.f32.mxu0 0.0
    %790 = vmatmul.mubr.f32.gmra.mxu0 %v628
    %v791 = vpop.f32.mrf.mxu0
    %v792 = vadd.f32 %v470, %v791
    %v793 = vpop.f32.mrf.mxu0
    %794 = vmatprep.mubr.f32.mxu0 0.0
    %795 = vmatmul.mubr.f32.gmra.mxu0 %v631
    %v796 = vpop.f32.mrf.mxu0
    %v797 = vadd.f32 %v475, %v796
    %v798 = vpop.f32.mrf.mxu0
    %799 = vmatprep.mubr.f32.mxu0 0.0
    %800 = vmatmul.mubr.f32.gmra.mxu0 %v634
    %v801 = vpop.f32.mrf.mxu0
    %v802 = vadd.f32 %v480, %v801
    %v803 = vpop.f32.mrf.mxu0
    %804 = vmatprep.mubr.f32.mxu0 0.0
    %805 = vmatmul.mubr.f32.gmra.mxu0 %v637
    %v806 = vpop.f32.mrf.mxu0
    %v807 = vadd.f32 %v485, %v806
    %v808 = vpop.f32.mrf.mxu0
    %809 = vmatprep.mubr.f32.mxu0 0.0
    %810 = vmatmul.mubr.f32.gmra.mxu0 %v640
    %v811 = vpop.f32.mrf.mxu0
    %v812 = vadd.f32 %v490, %v811
    %v813 = vpop.f32.mrf.mxu0
    %814 = vmatprep.mubr.f32.mxu0 0.0
    %815 = vmatmul.mubr.f32.gmra.mxu0 %v643
    %v816 = vpop.f32.mrf.mxu0
    %v817 = vadd.f32 %v495, %v816
    %v818 = vpop.f32.mrf.mxu0
    %819 = vmatprep.mubr.f32.mxu0 0.0
    %820 = vmatmul.mubr.f32.gmra.mxu0 %v646
    %v821 = vpop.f32.mrf.mxu0
    %v822 = vadd.f32 %v500, %v821
    %v823 = vpop.f32.mrf.mxu0
    %824 = vmatprep.mubr.f32.mxu0 0.0
    %825 = vmatmul.mubr.f32.gmra.mxu0 %v649
    %v826 = vpop.f32.mrf.mxu0
    %v827 = vadd.f32 %v505, %v826
    %v828 = vpop.f32.mrf.mxu0
    %829 = vmatprep.mubr.f32.mxu0 0.0
    %830 = vmatmul.mubr.f32.gmra.mxu0 %v652
    %v831 = vpop.f32.mrf.mxu0
    %v832 = vadd.f32 %v510, %v831
    %v833 = vpop.f32.mrf.mxu0
    %834 = vmatprep.mubr.f32.mxu0 0.0
    %835 = vmatmul.mubr.f32.gmra.mxu0 %v655
    %v836 = vpop.f32.mrf.mxu0
    %v837 = vadd.f32 %v515, %v836
    %v838 = vpop.f32.mrf.mxu0
    %839 = vmatprep.mubr.f32.mxu0 0.0
    %840 = vmatmul.mubr.f32.gmra.mxu0 %v658
    %v841 = vpop.f32.mrf.mxu0
    %v842 = vadd.f32 %v520, %v841
    %v843 = vpop.f32.mrf.mxu0
    %844 = vmatprep.mubr.f32.mxu0 0.0
    %845 = vmatmul.mubr.f32.gmra.mxu0 %v661
    %v846 = vpop.f32.mrf.mxu0
    %v847 = vadd.f32 %v525, %v846
    %v848 = vpop.f32.mrf.mxu0
    %849 = vmatprep.mubr.f32.mxu0 0.0
    %850 = vmatmul.mubr.f32.gmra.mxu0 %v664
    %v851 = vpop.f32.mrf.mxu0
    %v852 = vadd.f32 %v530, %v851
    %v853 = vpop.f32.mrf.mxu0
    %854 = vmatprep.mubr.f32.mxu0 0.0
    %855 = vmatmul.mubr.f32.gmra.mxu0 %v667
    %v856 = vpop.f32.mrf.mxu0
    %v857 = vadd.f32 %v535, %v856
    %v858 = vpop.f32.mrf.mxu0
    %859 = vmatprep.mubr.f32.mxu0 0.0
    %860 = vmatmul.mubr.f32.gmra.mxu0 %v670
    %v861 = vpop.f32.mrf.mxu0
    %v862 = vadd.f32 %v540, %v861
    %v863 = vpop.f32.mrf.mxu0
    %864 = vmatprep.mubr.f32.mxu0 0.0
    %865 = vmatmul.mubr.f32.gmra.mxu0 %v673
    %v866 = vpop.f32.mrf.mxu0
    %v867 = vadd.f32 %v545, %v866
    %v868 = vpop.f32.mrf.mxu0
    %869 = vmatprep.mubr.f32.mxu0 0.0
    %870 = vmatmul.mubr.f32.gmra.mxu0 %v676
    %v871 = vpop.f32.mrf.mxu0
    %v872 = vadd.f32 %v550, %v871
    %v873 = vpop.f32.mrf.mxu0
    %874 = vmatprep.mubr.f32.mxu0 0.0
    %875 = vmatmul.mubr.f32.gmra.mxu0 %v679
    %v876 = vpop.f32.mrf.mxu0
    %v877 = vadd.f32 %v555, %v876
    %v878 = vpop.f32.mrf.mxu0
    %879 = vmatprep.mubr.f32.mxu0 0.0
    %880 = vmatmul.mubr.f32.gmra.mxu0 %v682
    %v881 = vpop.f32.mrf.mxu0
    %v882 = vadd.f32 %v560, %v881
    %v883 = vpop.f32.mrf.mxu0
    %884 = vmatprep.mubr.f32.mxu0 0.0
    %885 = vmatmul.mubr.f32.gmra.mxu0 %v685
    %v886 = vpop.f32.mrf.mxu0
    %v887 = vadd.f32 %v565, %v886
    %v888 = vpop.f32.mrf.mxu0
    %889 = vmatprep.mubr.f32.mxu0 0.0
    %890 = vmatmul.mubr.f32.gmra.mxu0 %v688
    %v891 = vpop.f32.mrf.mxu0
    %v892 = vadd.f32 %v570, %v891
    %v893 = vpop.f32.mrf.mxu0
    %894 = vmatprep.mubr.f32.mxu0 0.0
    %895 = vmatmul.mubr.f32.gmra.mxu0 %v691
    %v896 = vpop.f32.mrf.mxu0
    %v897 = vadd.f32 %v575, %v896
    %v898 = vpop.f32.mrf.mxu0
    %899 = vmatprep.mubr.f32.mxu0 0.0
    %900 = vmatmul.mubr.f32.gmra.mxu0 %v694
    %v901 = vpop.f32.mrf.mxu0
    %v902 = vadd.f32 %v580, %v901
    %v903 = vpop.f32.mrf.mxu0
    %904 = vmatprep.mubr.f32.mxu0 0.0
    %905 = vmatmul.mubr.f32.gmra.mxu0 %v697
    %v906 = vpop.f32.mrf.mxu0
    %v907 = vadd.f32 %v585, %v906
    %v908 = vpop.f32.mrf.mxu0
    %909 = vmatprep.mubr.f32.mxu0 0.0
    %910 = vmatmul.mubr.f32.gmra.mxu0 %v700
    %v911 = vpop.f32.mrf.mxu0
    %v912 = vadd.f32 %v590, %v911
    %v913 = vpop.f32.mrf.mxu0
    %914 = vmatprep.mubr.f32.mxu0 0.0
    %915 = vmatmul.mubr.f32.gmra.mxu0 %v703
    %v916 = vpop.f32.mrf.mxu0
    %v917 = vadd.f32 %v595, %v916
    %v918 = vpop.f32.mrf.mxu0
    %919 = vmatprep.mubr.f32.mxu0 0.0
    %920 = vmatmul.mubr.f32.gmra.mxu0 %v706
    %v921 = vpop.f32.mrf.mxu0
    %v922 = vadd.f32 %v600, %v921
    %v923 = vpop.f32.mrf.mxu0
    %924 = vmatprep.mubr.f32.mxu0 0.0
    %925 = vmatmul.mubr.f32.gmra.mxu0 %v709
    %v926 = vpop.f32.mrf.mxu0
    %v927 = vadd.f32 %v605, %v926
    %v928 = vpop.f32.mrf.mxu0
    %929 = vmatprep.mubr.f32.mxu0 0.0
    %930 = vmatmul.mubr.f32.gmra.mxu0 %v712
    %v931 = vpop.f32.mrf.mxu0
    %v932 = vadd.f32 %v610, %v931
    %v933 = vpop.f32.mrf.mxu0
    %934 = vmatprep.mubr.f32.mxu0 0.0
    %935 = vmatmul.mubr.f32.gmra.mxu0 %v715
    %v936 = vpop.f32.mrf.mxu0
    %v937 = vadd.f32 %v615, %v936
    %v938 = vpop.f32.mrf.mxu0
    %939 = vmatprep.mubr.f32.mxu0 0.0
    %940 = vmatmul.mubr.f32.gmra.mxu0 %v718
    %v941 = vpop.f32.mrf.mxu0
    %v942 = vadd.f32 %v620, %v941
    %v943 = vpop.f32.mrf.mxu0
    %944 = vdwg.mxu0
    %v945 = vld [vmem:[#allocation2] sm:$0x1]
    %vm946 = vcmask 261120
    %v947 = vsel %vm946, %v787, 0.0
    %v948 = vsel %vm946, %v792, 0.0
    %v949 = vadd.f32 %v947, %v948
    %v950 = vsel %vm946, %v797, 0.0
    %v951 = vadd.f32 %v949, %v950
    %v952 = vsel %vm946, %v802, 0.0
    %v953 = vadd.f32 %v951, %v952
    %v954 = vsel %vm946, %v807, 0.0
    %v955 = vadd.f32 %v953, %v954
    %v956 = vsel %vm946, %v812, 0.0
    %v957 = vadd.f32 %v955, %v956
    %v958 = vsel %vm946, %v817, 0.0
    %v959 = vadd.f32 %v957, %v958
    %v960 = vsel %vm946, %v822, 0.0
    %v961 = vadd.f32 %v959, %v960
    %v962 = vsel %vm946, %v827, 0.0
    %v963 = vadd.f32 %v961, %v962
    %v964 = vsel %vm946, %v832, 0.0
    %v965 = vadd.f32 %v963, %v964
    %v966 = vsel %vm946, %v837, 0.0
    %v967 = vadd.f32 %v965, %v966
    %v968 = vsel %vm946, %v842, 0.0
    %v969 = vadd.f32 %v967, %v968
    %v970 = vsel %vm946, %v847, 0.0
    %v971 = vadd.f32 %v969, %v970
    %v972 = vsel %vm946, %v852, 0.0
    %v973 = vadd.f32 %v971, %v972
    %v974 = vsel %vm946, %v857, 0.0
    %v975 = vadd.f32 %v973, %v974
    %v976 = vsel %vm946, %v862, 0.0
    %v977 = vadd.f32 %v975, %v976
    %v978 = vsel %vm946, %v867, 0.0
    %v979 = vadd.f32 %v977, %v978
    %v980 = vsel %vm946, %v872, 0.0
    %v981 = vadd.f32 %v979, %v980
    %v982 = vsel %vm946, %v877, 0.0
    %v983 = vadd.f32 %v981, %v982
    %v984 = vsel %vm946, %v882, 0.0
    %v985 = vadd.f32 %v983, %v984
    %v986 = vsel %vm946, %v887, 0.0
    %v987 = vadd.f32 %v985, %v986
    %v988 = vsel %vm946, %v892, 0.0
    %v989 = vadd.f32 %v987, %v988
    %v990 = vsel %vm946, %v897, 0.0
    %v991 = vadd.f32 %v989, %v990
    %v992 = vsel %vm946, %v902, 0.0
    %v993 = vadd.f32 %v991, %v992
    %v994 = vsel %vm946, %v907, 0.0
    %v995 = vadd.f32 %v993, %v994
    %v996 = vsel %vm946, %v912, 0.0
    %v997 = vadd.f32 %v995, %v996
    %v998 = vsel %vm946, %v917, 0.0
    %v999 = vadd.f32 %v997, %v998
    %v1000 = vsel %vm946, %v922, 0.0
    %v1001 = vadd.f32 %v999, %v1000
    %v1002 = vsel %vm946, %v927, 0.0
    %v1003 = vadd.f32 %v1001, %v1002
    %v1004 = vsel %vm946, %v932, 0.0
    %v1005 = vadd.f32 %v1003, %v1004
    %v1006 = vsel %vm946, %v937, 0.0
    %v1007 = vadd.f32 %v1005, %v1006
    %v1008 = vsel %vm946, %v942, 0.0
    %v1009 = vadd.f32 %v1007, %v1008
    %v1010 = vrot.slane %v1009, 4
    %v1011 = vadd.f32 %v1009, %v1010
    %v1012 = vrot.slane %v1011, 2
    %v1013 = vadd.f32 %v1011, %v1012
    %v1014 = vrot.slane %v1013, 1
    %v1015 = vadd.f32 %v1013, %v1014
    %v1016 = vadd.f32 %v945, %v1015
    %vm1017 = vcmask 253952
    %1018 = vst.msk [vmem:[#allocation2] sm:$0x1] %vm1017, %v1016
    %v1019 = vld [vmem:[#allocation3] sm:$0x1]
    %v1020 = vmul.f32 %v787, %v787
    %v1021 = vmul.f32 %v792, %v792
    %v1022 = vmul.f32 %v797, %v797
    %v1023 = vmul.f32 %v802, %v802
    %v1024 = vmul.f32 %v807, %v807
    %v1025 = vmul.f32 %v812, %v812
    %v1026 = vmul.f32 %v817, %v817
    %v1027 = vmul.f32 %v822, %v822
    %v1028 = vmul.f32 %v827, %v827
    %v1029 = vmul.f32 %v832, %v832
    %v1030 = vmul.f32 %v837, %v837
    %v1031 = vmul.f32 %v842, %v842
    %v1032 = vmul.f32 %v847, %v847
    %v1033 = vmul.f32 %v852, %v852
    %v1034 = vmul.f32 %v857, %v857
    %v1035 = vmul.f32 %v862, %v862
    %v1036 = vmul.f32 %v867, %v867
    %v1037 = vmul.f32 %v872, %v872
    %v1038 = vmul.f32 %v877, %v877
    %v1039 = vmul.f32 %v882, %v882
    %v1040 = vmul.f32 %v887, %v887
    %v1041 = vmul.f32 %v892, %v892
    %v1042 = vmul.f32 %v897, %v897
    %v1043 = vmul.f32 %v902, %v902
    %v1044 = vmul.f32 %v907, %v907
    %v1045 = vmul.f32 %v912, %v912
    %v1046 = vmul.f32 %v917, %v917
    %v1047 = vmul.f32 %v922, %v922
    %v1048 = vmul.f32 %v927, %v927
    %v1049 = vmul.f32 %v932, %v932
    %v1050 = vmul.f32 %v937, %v937
    %v1051 = vmul.f32 %v942, %v942
    %v1052 = vsel %vm946, %v1020, 0.0
    %v1053 = vsel %vm946, %v1021, 0.0
    %v1054 = vadd.f32 %v1052, %v1053
    %v1055 = vsel %vm946, %v1022, 0.0
    %v1056 = vadd.f32 %v1054, %v1055
    %v1057 = vsel %vm946, %v1023, 0.0
    %v1058 = vadd.f32 %v1056, %v1057
    %v1059 = vsel %vm946, %v1024, 0.0
    %v1060 = vadd.f32 %v1058, %v1059
    %v1061 = vsel %vm946, %v1025, 0.0
    %v1062 = vadd.f32 %v1060, %v1061
    %v1063 = vsel %vm946, %v1026, 0.0
    %v1064 = vadd.f32 %v1062, %v1063
    %v1065 = vsel %vm946, %v1027, 0.0
    %v1066 = vadd.f32 %v1064, %v1065
    %v1067 = vsel %vm946, %v1028, 0.0
    %v1068 = vadd.f32 %v1066, %v1067
    %v1069 = vsel %vm946, %v1029, 0.0
    %v1070 = vadd.f32 %v1068, %v1069
    %v1071 = vsel %vm946, %v1030, 0.0
    %v1072 = vadd.f32 %v1070, %v1071
    %v1073 = vsel %vm946, %v1031, 0.0
    %v1074 = vadd.f32 %v1072, %v1073
    %v1075 = vsel %vm946, %v1032, 0.0
    %v1076 = vadd.f32 %v1074, %v1075
    %v1077 = vsel %vm946, %v1033, 0.0
    %v1078 = vadd.f32 %v1076, %v1077
    %v1079 = vsel %vm946, %v1034, 0.0
    %v1080 = vadd.f32 %v1078, %v1079
    %v1081 = vsel %vm946, %v1035, 0.0
    %v1082 = vadd.f32 %v1080, %v1081
    %v1083 = vsel %vm946, %v1036, 0.0
    %v1084 = vadd.f32 %v1082, %v1083
    %v1085 = vsel %vm946, %v1037, 0.0
    %v1086 = vadd.f32 %v1084, %v1085
    %v1087 = vsel %vm946, %v1038, 0.0
    %v1088 = vadd.f32 %v1086, %v1087
    %v1089 = vsel %vm946, %v1039, 0.0
    %v1090 = vadd.f32 %v1088, %v1089
    %v1091 = vsel %vm946, %v1040, 0.0
    %v1092 = vadd.f32 %v1090, %v1091
    %v1093 = vsel %vm946, %v1041, 0.0
    %v1094 = vadd.f32 %v1092, %v1093
    %v1095 = vsel %vm946, %v1042, 0.0
    %v1096 = vadd.f32 %v1094, %v1095
    %v1097 = vsel %vm946, %v1043, 0.0
    %v1098 = vadd.f32 %v1096, %v1097
    %v1099 = vsel %vm946, %v1044, 0.0
    %v1100 = vadd.f32 %v1098, %v1099
    %v1101 = vsel %vm946, %v1045, 0.0
    %v1102 = vadd.f32 %v1100, %v1101
    %v1103 = vsel %vm946, %v1046, 0.0
    %v1104 = vadd.f32 %v1102, %v1103
    %v1105 = vsel %vm946, %v1047, 0.0
    %v1106 = vadd.f32 %v1104, %v1105
    %v1107 = vsel %vm946, %v1048, 0.0
    %v1108 = vadd.f32 %v1106, %v1107
    %v1109 = vsel %vm946, %v1049, 0.0
    %v1110 = vadd.f32 %v1108, %v1109
    %v1111 = vsel %vm946, %v1050, 0.0
    %v1112 = vadd.f32 %v1110, %v1111
    %v1113 = vsel %vm946, %v1051, 0.0
    %v1114 = vadd.f32 %v1112, %v1113
    %v1115 = vrot.slane %v1114, 4
    %v1116 = vadd.f32 %v1114, %v1115
    %v1117 = vrot.slane %v1116, 2
    %v1118 = vadd.f32 %v1116, %v1117
    %v1119 = vrot.slane %v1118, 1
    %v1120 = vadd.f32 %v1118, %v1119
    %v1121 = vadd.f32 %v1019, %v1120
    %1122 = vst.msk [vmem:[#allocation3] sm:$0x1] %vm1017, %v1121
    %s1123 = smul.u32 0, 256
    %s1124 = scalar_lea.vmem [#allocation4], %s1123
    %1125 = vst.msk [vmem:[%s1124] sm:$0xff] %vm946, %v787
    %1126 = vst.msk [vmem:[%s1124 + $0x8] sm:$0xff] %vm946, %v792
    %1127 = vst.msk [vmem:[%s1124 + $0x10] sm:$0xff] %vm946, %v797
    %1128 = vst.msk [vmem:[%s1124 + $0x18] sm:$0xff] %vm946, %v802
    %1129 = vst.msk [vmem:[%s1124 + $0x20] sm:$0xff] %vm946, %v807
    %1130 = vst.msk [vmem:[%s1124 + $0x28] sm:$0xff] %vm946, %v812
    %1131 = vst.msk [vmem:[%s1124 + $0x30] sm:$0xff] %vm946, %v817
    %1132 = vst.msk [vmem:[%s1124 + $0x38] sm:$0xff] %vm946, %v822
    %1133 = vst.msk [vmem:[%s1124 + $0x40] sm:$0xff] %vm946, %v827
    %1134 = vst.msk [vmem:[%s1124 + $0x48] sm:$0xff] %vm946, %v832
    %1135 = vst.msk [vmem:[%s1124 + $0x50] sm:$0xff] %vm946, %v837
    %1136 = vst.msk [vmem:[%s1124 + $0x58] sm:$0xff] %vm946, %v842
    %1137 = vst.msk [vmem:[%s1124 + $0x60] sm:$0xff] %vm946, %v847
    %1138 = vst.msk [vmem:[%s1124 + $0x68] sm:$0xff] %vm946, %v852
    %1139 = vst.msk [vmem:[%s1124 + $0x70] sm:$0xff] %vm946, %v857
    %1140 = vst.msk [vmem:[%s1124 + $0x78] sm:$0xff] %vm946, %v862
    %1141 = vst.msk [vmem:[%s1124 + $0x80] sm:$0xff] %vm946, %v867
    %1142 = vst.msk [vmem:[%s1124 + $0x88] sm:$0xff] %vm946, %v872
    %1143 = vst.msk [vmem:[%s1124 + $0x90] sm:$0xff] %vm946, %v877
    %1144 = vst.msk [vmem:[%s1124 + $0x98] sm:$0xff] %vm946, %v882
    %1145 = vst.msk [vmem:[%s1124 + $0xa0] sm:$0xff] %vm946, %v887
    %1146 = vst.msk [vmem:[%s1124 + $0xa8] sm:$0xff] %vm946, %v892
    %1147 = vst.msk [vmem:[%s1124 + $0xb0] sm:$0xff] %vm946, %v897
    %1148 = vst.msk [vmem:[%s1124 + $0xb8] sm:$0xff] %vm946, %v902
    %1149 = vst.msk [vmem:[%s1124 + $0xc0] sm:$0xff] %vm946, %v907
    %1150 = vst.msk [vmem:[%s1124 + $0xc8] sm:$0xff] %vm946, %v912
    %1151 = vst.msk [vmem:[%s1124 + $0xd0] sm:$0xff] %vm946, %v917
    %1152 = vst.msk [vmem:[%s1124 + $0xd8] sm:$0xff] %vm946, %v922
    %1153 = vst.msk [vmem:[%s1124 + $0xe0] sm:$0xff] %vm946, %v927
    %1154 = vst.msk [vmem:[%s1124 + $0xe8] sm:$0xff] %vm946, %v932
    %1155 = vst.msk [vmem:[%s1124 + $0xf0] sm:$0xff] %vm946, %v937
    %1156 = vst.msk [vmem:[%s1124 + $0xf8] sm:$0xff] %vm946, %v942
    // Predicated region
    $region34: #{tpu_custom_call.1} parent=1 // pred_check
      %p1157 = pneg %p28
    $region35: #{tpu_custom_call.1} parent=1 // pred_check_branch
      %1159 = sbr.rel (%p1157) target = $region37
    $region36: #{tpu_custom_call.1} parent=1 // pred_region
      %v1160 = vld [vmem:[#allocation2] sm:$0x1]
      %v1161 = vmul.f32 %v1160, 0.00390625
      %v1162 = vld [vmem:[#allocation3] sm:$0x1]
      %v1163 = vmul.f32 %v1162, 0.00390625
      %v1164 = vmul.f32 %v1161, %v1161
      %v1165 = vsub.f32 %v1163, %v1164
      %v1166 = vmax.f32 %v1165, 0.0
      %v1167 = vadd.f32 %v1166, 1e-05
      %v1168 = vrsqrt.pop %v1167
      %v1169 = vld [vmem:[#allocation4] sm:$0xff]
      %v1170 = vld [vmem:[#allocation4 + $0x8] sm:$0xff]
      %v1171 = vld [vmem:[#allocation4 + $0x10] sm:$0xff]
      %v1172 = vld [vmem:[#allocation4 + $0x18] sm:$0xff]
      %v1173 = vld [vmem:[#allocation4 + $0x20] sm:$0xff]
      %v1174 = vld [vmem:[#allocation4 + $0x28] sm:$0xff]
      %v1175 = vld [vmem:[#allocation4 + $0x30] sm:$0xff]
      %v1176 = vld [vmem:[#allocation4 + $0x38] sm:$0xff]
      %v1177 = vld [vmem:[#allocation4 + $0x40] sm:$0xff]
      %v1178 = vld [vmem:[#allocation4 + $0x48] sm:$0xff]
      %v1179 = vld [vmem:[#allocation4 + $0x50] sm:$0xff]
      %v1180 = vld [vmem:[#allocation4 + $0x58] sm:$0xff]
      %v1181 = vld [vmem:[#allocation4 + $0x60] sm:$0xff]
      %v1182 = vld [vmem:[#allocation4 + $0x68] sm:$0xff]
      %v1183 = vld [vmem:[#allocation4 + $0x70] sm:$0xff]
      %v1184 = vld [vmem:[#allocation4 + $0x78] sm:$0xff]
      %v1185 = vld [vmem:[#allocation4 + $0x80] sm:$0xff]
      %v1186 = vld [vmem:[#allocation4 + $0x88] sm:$0xff]
      %v1187 = vld [vmem:[#allocation4 + $0x90] sm:$0xff]
      %v1188 = vld [vmem:[#allocation4 + $0x98] sm:$0xff]
      %v1189 = vld [vmem:[#allocation4 + $0xa0] sm:$0xff]
      %v1190 = vld [vmem:[#allocation4 + $0xa8] sm:$0xff]
      %v1191 = vld [vmem:[#allocation4 + $0xb0] sm:$0xff]
      %v1192 = vld [vmem:[#allocation4 + $0xb8] sm:$0xff]
      %v1193 = vld [vmem:[#allocation4 + $0xc0] sm:$0xff]
      %v1194 = vld [vmem:[#allocation4 + $0xc8] sm:$0xff]
      %v1195 = vld [vmem:[#allocation4 + $0xd0] sm:$0xff]
      %v1196 = vld [vmem:[#allocation4 + $0xd8] sm:$0xff]
      %v1197 = vld [vmem:[#allocation4 + $0xe0] sm:$0xff]
      %v1198 = vld [vmem:[#allocation4 + $0xe8] sm:$0xff]
      %v1199 = vld [vmem:[#allocation4 + $0xf0] sm:$0xff]
      %v1200 = vld [vmem:[#allocation4 + $0xf8] sm:$0xff]
      %v1202 = vlaneseq
      %v1203 = vshrl.u32 %v1202, 7
      %v1204 = vsub.s32 0, %v1203
      %v1205 = vrot.slane %v1161, %v1204
      %v1207 = vsub.f32 %v1169, %v1205
      %v1208 = vsub.f32 %v1170, %v1205
      %v1209 = vsub.f32 %v1171, %v1205
      %v1210 = vsub.f32 %v1172, %v1205
      %v1211 = vsub.f32 %v1173, %v1205
      %v1212 = vsub.f32 %v1174, %v1205
      %v1213 = vsub.f32 %v1175, %v1205
      %v1214 = vsub.f32 %v1176, %v1205
      %v1215 = vsub.f32 %v1177, %v1205
      %v1216 = vsub.f32 %v1178, %v1205
      %v1217 = vsub.f32 %v1179, %v1205
      %v1218 = vsub.f32 %v1180, %v1205
      %v1219 = vsub.f32 %v1181, %v1205
      %v1220 = vsub.f32 %v1182, %v1205
      %v1221 = vsub.f32 %v1183, %v1205
      %v1222 = vsub.f32 %v1184, %v1205
      %v1223 = vsub.f32 %v1185, %v1205
      %v1224 = vsub.f32 %v1186, %v1205
      %v1225 = vsub.f32 %v1187, %v1205
      %v1226 = vsub.f32 %v1188, %v1205
      %v1227 = vsub.f32 %v1189, %v1205
      %v1228 = vsub.f32 %v1190, %v1205
      %v1229 = vsub.f32 %v1191, %v1205
      %v1230 = vsub.f32 %v1192, %v1205
      %v1231 = vsub.f32 %v1193, %v1205
      %v1232 = vsub.f32 %v1194, %v1205
      %v1233 = vsub.f32 %v1195, %v1205
      %v1234 = vsub.f32 %v1196, %v1205
      %v1235 = vsub.f32 %v1197, %v1205
      %v1236 = vsub.f32 %v1198, %v1205
      %v1237 = vsub.f32 %v1199, %v1205
      %v1238 = vsub.f32 %v1200, %v1205
      %v1240 = vlaneseq
      %v1241 = vshrl.u32 %v1240, 7
      %v1242 = vsub.s32 0, %v1241
      %v1243 = vrot.slane %v1168, %v1242
      %v1245 = vmul.f32 %v1207, %v1243
      %v1246 = vmul.f32 %v1208, %v1243
      %v1247 = vmul.f32 %v1209, %v1243
      %v1248 = vmul.f32 %v1210, %v1243
      %v1249 = vmul.f32 %v1211, %v1243
      %v1250 = vmul.f32 %v1212, %v1243
      %v1251 = vmul.f32 %v1213, %v1243
      %v1252 = vmul.f32 %v1214, %v1243
      %v1253 = vmul.f32 %v1215, %v1243
      %v1254 = vmul.f32 %v1216, %v1243
      %v1255 = vmul.f32 %v1217, %v1243
      %v1256 = vmul.f32 %v1218, %v1243
      %v1257 = vmul.f32 %v1219, %v1243
      %v1258 = vmul.f32 %v1220, %v1243
      %v1259 = vmul.f32 %v1221, %v1243
      %v1260 = vmul.f32 %v1222, %v1243
      %v1261 = vmul.f32 %v1223, %v1243
      %v1262 = vmul.f32 %v1224, %v1243
      %v1263 = vmul.f32 %v1225, %v1243
      %v1264 = vmul.f32 %v1226, %v1243
      %v1265 = vmul.f32 %v1227, %v1243
      %v1266 = vmul.f32 %v1228, %v1243
      %v1267 = vmul.f32 %v1229, %v1243
      %v1268 = vmul.f32 %v1230, %v1243
      %v1269 = vmul.f32 %v1231, %v1243
      %v1270 = vmul.f32 %v1232, %v1243
      %v1271 = vmul.f32 %v1233, %v1243
      %v1272 = vmul.f32 %v1234, %v1243
      %v1273 = vmul.f32 %v1235, %v1243
      %v1274 = vmul.f32 %v1236, %v1243
      %v1275 = vmul.f32 %v1237, %v1243
      %v1276 = vmul.f32 %v1238, %v1243
      %vm1277 = vcmp.ge.f32.partialorder %v1245, 0.0
      %vm1278 = vcmp.ge.f32.partialorder %v1246, 0.0
      %vm1279 = vcmp.ge.f32.partialorder %v1247, 0.0
      %vm1280 = vcmp.ge.f32.partialorder %v1248, 0.0
      %vm1281 = vcmp.ge.f32.partialorder %v1249, 0.0
      %vm1282 = vcmp.ge.f32.partialorder %v1250, 0.0
      %vm1283 = vcmp.ge.f32.partialorder %v1251, 0.0
      %vm1284 = vcmp.ge.f32.partialorder %v1252, 0.0
      %vm1285 = vcmp.ge.f32.partialorder %v1253, 0.0
      %vm1286 = vcmp.ge.f32.partialorder %v1254, 0.0
      %vm1287 = vcmp.ge.f32.partialorder %v1255, 0.0
      %vm1288 = vcmp.ge.f32.partialorder %v1256, 0.0
      %vm1289 = vcmp.ge.f32.partialorder %v1257, 0.0
      %vm1290 = vcmp.ge.f32.partialorder %v1258, 0.0
      %vm1291 = vcmp.ge.f32.partialorder %v1259, 0.0
      %vm1292 = vcmp.ge.f32.partialorder %v1260, 0.0
      %vm1293 = vcmp.ge.f32.partialorder %v1261, 0.0
      %vm1294 = vcmp.ge.f32.partialorder %v1262, 0.0
      %vm1295 = vcmp.ge.f32.partialorder %v1263, 0.0
      %vm1296 = vcmp.ge.f32.partialorder %v1264, 0.0
      %vm1297 = vcmp.ge.f32.partialorder %v1265, 0.0
      %vm1298 = vcmp.ge.f32.partialorder %v1266, 0.0
      %vm1299 = vcmp.ge.f32.partialorder %v1267, 0.0
      %vm1300 = vcmp.ge.f32.partialorder %v1268, 0.0
      %vm1301 = vcmp.ge.f32.partialorder %v1269, 0.0
      %vm1302 = vcmp.ge.f32.partialorder %v1270, 0.0
      %vm1303 = vcmp.ge.f32.partialorder %v1271, 0.0
      %vm1304 = vcmp.ge.f32.partialorder %v1272, 0.0
      %vm1305 = vcmp.ge.f32.partialorder %v1273, 0.0
      %vm1306 = vcmp.ge.f32.partialorder %v1274, 0.0
      %vm1307 = vcmp.ge.f32.partialorder %v1275, 0.0
      %vm1308 = vcmp.ge.f32.partialorder %v1276, 0.0
      %v1309 = vmul.f32 %v1245, 0.01
      %v1310 = vmul.f32 %v1246, 0.01
      %v1311 = vmul.f32 %v1247, 0.01
      %v1312 = vmul.f32 %v1248, 0.01
      %v1313 = vmul.f32 %v1249, 0.01
      %v1314 = vmul.f32 %v1250, 0.01
      %v1315 = vmul.f32 %v1251, 0.01
      %v1316 = vmul.f32 %v1252, 0.01
      %v1317 = vmul.f32 %v1253, 0.01
      %v1318 = vmul.f32 %v1254, 0.01
      %v1319 = vmul.f32 %v1255, 0.01
      %v1320 = vmul.f32 %v1256, 0.01
      %v1321 = vmul.f32 %v1257, 0.01
      %v1322 = vmul.f32 %v1258, 0.01
      %v1323 = vmul.f32 %v1259, 0.01
      %v1324 = vmul.f32 %v1260, 0.01
      %v1325 = vmul.f32 %v1261, 0.01
      %v1326 = vmul.f32 %v1262, 0.01
      %v1327 = vmul.f32 %v1263, 0.01
      %v1328 = vmul.f32 %v1264, 0.01
      %v1329 = vmul.f32 %v1265, 0.01
      %v1330 = vmul.f32 %v1266, 0.01
      %v1331 = vmul.f32 %v1267, 0.01
      %v1332 = vmul.f32 %v1268, 0.01
      %v1333 = vmul.f32 %v1269, 0.01
      %v1334 = vmul.f32 %v1270, 0.01
      %v1335 = vmul.f32 %v1271, 0.01
      %v1336 = vmul.f32 %v1272, 0.01
      %v1337 = vmul.f32 %v1273, 0.01
      %v1338 = vmul.f32 %v1274, 0.01
      %v1339 = vmul.f32 %v1275, 0.01
      %v1340 = vmul.f32 %v1276, 0.01
      %v1341 = vsel %vm1277, %v1245, %v1309
      %v1342 = vsel %vm1278, %v1246, %v1310
      %v1343 = vsel %vm1279, %v1247, %v1311
      %v1344 = vsel %vm1280, %v1248, %v1312
      %v1345 = vsel %vm1281, %v1249, %v1313
      %v1346 = vsel %vm1282, %v1250, %v1314
      %v1347 = vsel %vm1283, %v1251, %v1315
      %v1348 = vsel %vm1284, %v1252, %v1316
      %v1349 = vsel %vm1285, %v1253, %v1317
      %v1350 = vsel %vm1286, %v1254, %v1318
      %v1351 = vsel %vm1287, %v1255, %v1319
      %v1352 = vsel %vm1288, %v1256, %v1320
      %v1353 = vsel %vm1289, %v1257, %v1321
      %v1354 = vsel %vm1290, %v1258, %v1322
      %v1355 = vsel %vm1291, %v1259, %v1323
      %v1356 = vsel %vm1292, %v1260, %v1324
      %v1357 = vsel %vm1293, %v1261, %v1325
      %v1358 = vsel %vm1294, %v1262, %v1326
      %v1359 = vsel %vm1295, %v1263, %v1327
      %v1360 = vsel %vm1296, %v1264, %v1328
      %v1361 = vsel %vm1297, %v1265, %v1329
      %v1362 = vsel %vm1298, %v1266, %v1330
      %v1363 = vsel %vm1299, %v1267, %v1331
      %v1364 = vsel %vm1300, %v1268, %v1332
      %v1365 = vsel %vm1301, %v1269, %v1333
      %v1366 = vsel %vm1302, %v1270, %v1334
      %v1367 = vsel %vm1303, %v1271, %v1335
      %v1368 = vsel %vm1304, %v1272, %v1336
      %v1369 = vsel %vm1305, %v1273, %v1337
      %v1370 = vsel %vm1306, %v1274, %v1338
      %v1371 = vsel %vm1307, %v1275, %v1339
      %v1372 = vsel %vm1308, %v1276, %v1340
      %v1373 = vld [vmem:[%s5] sm:$0x1]
      %s1374 = sld [smem:[#allocation5]]
      %v1375 = vstv %s1374
      %v1377 = vsel %vm946, %v1373, 0
      %v1380 = vsel %vm946, %v1341, 0
      %v1383 = vsel %vm946, %v1342, 0
      %v1386 = vsel %vm946, %v1343, 0
      %v1389 = vsel %vm946, %v1344, 0
      %v1392 = vsel %vm946, %v1345, 0
      %v1395 = vsel %vm946, %v1346, 0
      %v1398 = vsel %vm946, %v1347, 0
      %v1401 = vsel %vm946, %v1348, 0
      %v1404 = vsel %vm946, %v1349, 0
      %v1407 = vsel %vm946, %v1350, 0
      %v1410 = vsel %vm946, %v1351, 0
      %v1413 = vsel %vm946, %v1352, 0
      %v1416 = vsel %vm946, %v1353, 0
      %v1419 = vsel %vm946, %v1354, 0
      %v1422 = vsel %vm946, %v1355, 0
      %v1425 = vsel %vm946, %v1356, 0
      %v1428 = vsel %vm946, %v1357, 0
      %v1431 = vsel %vm946, %v1358, 0
      %v1434 = vsel %vm946, %v1359, 0
      %v1437 = vsel %vm946, %v1360, 0
      %v1440 = vsel %vm946, %v1361, 0
      %v1443 = vsel %vm946, %v1362, 0
      %v1446 = vsel %vm946, %v1363, 0
      %v1449 = vsel %vm946, %v1364, 0
      %v1452 = vsel %vm946, %v1365, 0
      %v1455 = vsel %vm946, %v1366, 0
      %v1458 = vsel %vm946, %v1367, 0
      %v1461 = vsel %vm946, %v1368, 0
      %v1464 = vsel %vm946, %v1369, 0
      %v1467 = vsel %vm946, %v1370, 0
      %v1470 = vsel %vm946, %v1371, 0
      %v1473 = vsel %vm946, %v1372, 0
      %1475 = vmatprep.subr.mxu0 0.0
      %1476 = vmatpush1.xpose.msra.mxu0 %v1425
      %1477 = vmatprep.subr.mxu0 0.0
      %1478 = vmatpush1.xpose.msra.mxu0 %v1422
      %1479 = vmatprep.subr.mxu0 0.0
      %1480 = vmatpush1.xpose.msra.mxu0 %v1419
      %1481 = vmatprep.subr.mxu0 0.0
      %1482 = vmatpush1.xpose.msra.mxu0 %v1416
      %1483 = vmatprep.subr.mxu0 0.0
      %1484 = vmatpush1.xpose.msra.mxu0 %v1413
      %1485 = vmatprep.subr.mxu0 0.0
      %1486 = vmatpush1.xpose.msra.mxu0 %v1410
      %1487 = vmatprep.subr.mxu0 0.0
      %1488 = vmatpush1.xpose.msra.mxu0 %v1407
      %1489 = vmatprep.subr.mxu0 0.0
      %1490 = vmatpush1.xpose.msra.mxu0 %v1404
      %1491 = vmatprep.subr.mxu0 0.0
      %1492 = vmatpush1.xpose.msra.mxu0 %v1401
      %1493 = vmatprep.subr.mxu0 0.0
      %1494 = vmatpush1.xpose.msra.mxu0 %v1398
      %1495 = vmatprep.subr.mxu0 0.0
      %1496 = vmatpush1.xpose.msra.mxu0 %v1395
      %1497 = vmatprep.subr.mxu0 0.0
      %1498 = vmatpush1.xpose.msra.mxu0 %v1392
      %1499 = vmatprep.subr.mxu0 0.0
      %1500 = vmatpush1.xpose.msra.mxu0 %v1389
      %1501 = vmatprep.subr.mxu0 0.0
      %1502 = vmatpush1.xpose.msra.mxu0 %v1386
      %1503 = vmatprep.subr.mxu0 0.0
      %1504 = vmatpush1.xpose.msra.mxu0 %v1383
      %1505 = vmatprep.subr.mxu0 0.0
      %1506 = vmatpush1.xpose.msra.mxu0 %v1380
      %1507 = vmatprep.subr.mxu0 0.0
      %1508 = vmatpush2.xpose.msra.mxu0 %v1473
      %1509 = vmatprep.subr.mxu0 0.0
      %1510 = vmatpush2.xpose.msra.mxu0 %v1470
      %1511 = vmatprep.subr.mxu0 0.0
      %1512 = vmatpush2.xpose.msra.mxu0 %v1467
      %1513 = vmatprep.subr.mxu0 0.0
      %1514 = vmatpush2.xpose.msra.mxu0 %v1464
      %1515 = vmatprep.subr.mxu0 0.0
      %1516 = vmatpush2.xpose.msra.mxu0 %v1461
      %1517 = vmatprep.subr.mxu0 0.0
      %1518 = vmatpush2.xpose.msra.mxu0 %v1458
      %1519 = vmatprep.subr.mxu0 0.0
      %1520 = vmatpush2.xpose.msra.mxu0 %v1455
      %1521 = vmatprep.subr.mxu0 0.0
      %1522 = vmatpush2.xpose.msra.mxu0 %v1452
      %1523 = vmatprep.subr.mxu0 0.0
      %1524 = vmatpush2.xpose.msra.mxu0 %v1449
      %1525 = vmatprep.subr.mxu0 0.0
      %1526 = vmatpush2.xpose.msra.mxu0 %v1446
      %1527 = vmatprep.subr.mxu0 0.0
      %1528 = vmatpush2.xpose.msra.mxu0 %v1443
      %1529 = vmatprep.subr.mxu0 0.0
      %1530 = vmatpush2.xpose.msra.mxu0 %v1440
      %1531 = vmatprep.subr.mxu0 0.0
      %1532 = vmatpush2.xpose.msra.mxu0 %v1437
      %1533 = vmatprep.subr.mxu0 0.0
      %1534 = vmatpush2.xpose.msra.mxu0 %v1434
      %1535 = vmatprep.subr.mxu0 0.0
      %1536 = vmatpush2.xpose.msra.mxu0 %v1431
      %1537 = vmatprep.subr.mxu0 0.0
      %1538 = vmatpush2.xpose.msra.mxu0 %v1428
      %1539 = vmatprep.mubr.f32.mxu0 0.0
      %1540 = vmatmul.mubr.f32.gmra.mxu0 %v1377
      %v1541 = vpop.f32.mrf.mxu0
      %v1542 = vadd.f32 %v1375, %v1541
      %v1543 = vpop.f32.mrf.mxu0
      %v1544 = vadd.f32 %v1375, %v1543
      %1545 = vdwg.mxu0
      %v1546 = vmax.f32 %v1542, 0.0
      %v1547 = vmax.f32 %v1544, 0.0
      %v1548 = vand.u32 2147483647, %v1542
      %v1549 = vand.u32 2147483647, %v1544
      %v1550 = vsub.f32 0.0, %v1548
      %v1551 = vsub.f32 0.0, %v1549
      %v1552 = vmul.f32 %v1550, 1.442695
      %v1553 = vpow.pop %v1552
      %v1554 = vmul.f32 %v1551, 1.442695
      %v1555 = vpow.pop %v1554
      %v1556 = vadd.f32 %v1553, 1.0
      %v1557 = vadd.f32 %v1555, 1.0
      %v1558 = vlog2.pop %v1556
      %v1559 = vmul.f32 %v1558, 0.6931472
      %v1560 = vlog2.pop %v1557
      %v1561 = vmul.f32 %v1560, 0.6931472
      %v1562 = vadd.f32 %v1546, %v1559
      %v1563 = vadd.f32 %v1547, %v1561
      %v1564 = vsub.f32 %v1542, %v1562
      %v1565 = vsub.f32 %v1544, %v1563
      %v1566 = vmax.f32 %v1564, -100.0
      %v1567 = vmax.f32 %v1565, -100.0
      %v1568 = vsub.f32 0.0, %v1562
      %v1569 = vsub.f32 0.0, %v1563
      %v1570 = vmax.f32 %v1568, -100.0
      %v1571 = vmax.f32 %v1569, -100.0
      %v1572 = vld [vmem:[%s2] sm:$0x3]
      %v1575 = vcombine.low %v1566, %v1567
      %v1577 = vunpack.c.l.s4 1966171168
      %v1578 = vunpack.c.0.s8 %v1577
      %v1579 = vlaneseq
      %v1580 = vshrl.u32 %v1579, 7
      %v1581 = vsub.s32 %v1578, %v1580
      %v1582 = vrot.slane %v1575, %v1581
      %v1584 = vunpack.c.l.s4 1966171168
      %v1585 = vunpack.c.0.s8 %v1584
      %v1586 = vlaneseq
      %v1587 = vshrl.u32 %v1586, 7
      %v1588 = vsub.s32 %v1585, %v1587
      %v1589 = vrot.slane %v1582, %v1588
      %v1591 = vmul.f32 %v1572, %v1589
      %v1592 = vsub.f32 1.0, %v1572
      %v1595 = vcombine.low %v1570, %v1571
      %v1597 = vunpack.c.l.s4 1966171168
      %v1598 = vunpack.c.0.s8 %v1597
      %v1599 = vlaneseq
      %v1600 = vshrl.u32 %v1599, 7
      %v1601 = vsub.s32 %v1598, %v1600
      %v1602 = vrot.slane %v1595, %v1601
      %v1604 = vunpack.c.l.s4 1966171168
      %v1605 = vunpack.c.0.s8 %v1604
      %v1606 = vlaneseq
      %v1607 = vshrl.u32 %v1606, 7
      %v1608 = vsub.s32 %v1605, %v1607
      %v1609 = vrot.slane %v1602, %v1608
      %v1611 = vmul.f32 %v1592, %v1609
      %v1612 = vadd.f32 %v1591, %v1611
      %v1614 = vlaneseq
      %v1615 = vshrl.u32 %v1614, 7
      %v1616 = vsub.s32 0, %v1615
      %v1617 = vrot.slane %v1612, %v1616
      %v1618 = vlaneseq
      %v1619 = vshrl.u32 %v1618, 7
      %v1620 = vsub.s32 1, %v1619
      %v1621 = vrot.slane %v1612, %v1620
      %vm1624 = vcmask 1040384
      %v1625 = vsel %vm1624, %v1617, 0.0
      %v1626 = vsel %vm1624, %v1621, 0.0
      %v1627 = vadd.f32 %v1625, %v1626
      %1628 = vadd.xlane.f32.xlu0 %v1627
      %v1629 = vpop.xlane.xlu0 %1628
      %v1630 = vmul.f32 %v1629, 0.00390625
      %v1631 = vsub.f32 0.0, %v1630
      %vm1632 = vcmask 0
      %1633 = vst.msk [vmem:[#allocation6] sm:$0x1] %vm1632, %v1631
    $region37: #{tpu_custom_call.1} parent=1 // pred_fallthru
      _
    // Predicated region
    $region38: #{tpu_custom_call.1} parent=1 // pred_check
      _
    $region39: #{tpu_custom_call.1} parent=1 // pred_check_branch
      %1635 = sbr.rel (0) target = $region41
    $region40: #{tpu_custom_call.1} parent=1 // pred_region
      %s1637 = ssub.s32 16, 16
      %1638 = vsyncadd [#allocation7], %s1637
      %s1640 = sshll.u32 [#allocation6], 4
      %s1641 = int_to_ptr.vmem [resolvable:$true] %s1640
      %1643 = dma.vmem_to_hbm [thread:$0]  %s1641, 16, %s7, [#allocation7]
    $region41: #{tpu_custom_call.1} parent=1 // pred_fallthru
      _
    // Predicated region
    $region42: #{tpu_custom_call.1} parent=1 // pred_check
      _
    $region43: #{tpu_custom_call.1} parent=1 // pred_check_branch
      %1645 = sbr.rel (0) target = $region45
    $region44: #{tpu_custom_call.1} parent=1 // pred_region
      %1646 = dma.done [#allocation7], 16
    $region45: #{tpu_custom_call.1} parent=1 // pred_fallthru
      _
    %1647 = vsyncpa [#allocation7], 1

</llo_original>
